<compile_context>
chip_gen: v7x
topology: tpu7x:2x2x1
jax: 0.10.0
libtpu: 0.0.40
codegen_flags: <defaults>
</compile_context>

<pallas_src>
import functools

import jax
import jax.numpy as jnp
from jax.experimental import pallas as pl
from jax.experimental.pallas import tpu as pltpu


def _round_up(x, m):
    return (x + m - 1) // m * m


def _nbytes(shape, dtype):
    n = 1
    for d in shape:
        n *= int(d)
    return n * jnp.dtype(dtype).itemsize


def _sigmoid(x):
    # tanh-form sigmoid: keeps the gate nonlinearity on the EUP (no VALU divide).
    return 0.5 * (jnp.tanh(0.5 * x) + 1.0)


def decoder_kernel(e_ref, h_ref, c_ref, enc_ref, mbias_ref,
                   wh_ref, we_ref, ba_ref, va_ref,
                   wihe_ref, wihw_ref, whh_ref, bl_ref,
                   fcwh_ref, fcwe_ref, fcb_ref,
                   pred_ref, hout_ref, cout_ref,
                   mix_ref, *, s_chunk):
    f32 = jnp.float32
    bf16 = jnp.bfloat16
    TB, Sp, H = enc_ref.shape

    # ---- attention + LSTM: once per batch tile (first vocab tile only) ------
    @pl.when(pl.program_id(1) == 0)
    def _():
        e_b = e_ref[...]                       # (TB, E) bf16
        h = h_ref[...]                         # (TB, H) f32
        c = c_ref[...]                         # (TB, H) f32
        h_b = h.astype(bf16)

        # per-row term of the Bahdanau energy; attention bias folded in once
        hb = jnp.dot(h_b, wh_ref[...], preferred_element_type=f32) + ba_ref[...]
        v_vec = va_ref[...]                    # (1, H)

        # online masked softmax + weighted context, streamed over S chunks so
        # no (TB, Sp, H) f32 intermediate larger than one chunk exists.
        m_run = jnp.full((TB, 1), -jnp.inf, f32)
        l_run = jnp.zeros((TB, 1), f32)
        w_acc = jnp.zeros((TB, H), f32)
        for ci in range(Sp // s_chunk):
            s0 = ci * s_chunk
            enc_c = enc_ref[:, pl.ds(s0, s_chunk), :]             # (TB, SC, H) bf16
            ew = jnp.dot(enc_c.reshape(TB * s_chunk, H), we_ref[...],
                         preferred_element_type=f32).reshape(TB, s_chunk, H)
            energy = jnp.tanh(ew + hb[:, None, :])                # (TB, SC, H)
            score = (jnp.sum(energy * v_vec, axis=-1)
                     + mbias_ref[:, pl.ds(s0, s_chunk)])          # (TB, SC)
            m_new = jnp.maximum(m_run, jnp.max(score, axis=-1, keepdims=True))
            alpha = jnp.exp(m_run - m_new)
            p = jnp.exp(score - m_new)                            # (TB, SC)
            l_run = alpha * l_run + jnp.sum(p, axis=-1, keepdims=True)
            # TODO(synk): for very large S contract p against enc_c on the MXU
            # instead of the VPU broadcast-mult + sublane reduce.
            w_acc = alpha * w_acc + jnp.sum(p[:, :, None] * enc_c.astype(f32), axis=1)
            m_run = m_new
        weighted = w_acc * pl.reciprocal(l_run, approx=True)      # (TB, H)

        # single-step LSTM cell (num_layers = 1), PyTorch gate order i,f,g,o;
        # hidden/cell state kept in f32 (bf16 only on MXU operands).
        w_b = weighted.astype(bf16)
        gates = (jnp.dot(e_b, wihe_ref[...], preferred_element_type=f32)
                 + jnp.dot(w_b, wihw_ref[...], preferred_element_type=f32)
                 + jnp.dot(h_b, whh_ref[...], preferred_element_type=f32)
                 + bl_ref[...])                                   # (TB, 4H)
        i_g = _sigmoid(gates[:, 0 * H:1 * H])
        f_g = _sigmoid(gates[:, 1 * H:2 * H])
        g_g = jnp.tanh(gates[:, 2 * H:3 * H])
        o_g = _sigmoid(gates[:, 3 * H:4 * H])
        c_new = f_g * c + i_g * g_g
        h_new = o_g * jnp.tanh(c_new)

        hout_ref[...] = h_new
        cout_ref[...] = c_new
        mix_ref[...] = (h_new * weighted).astype(bf16)            # reused by all V tiles

    # ---- fc head: runs for every (batch tile, vocab tile) --------------------
    pred_ref[...] = (jnp.dot(mix_ref[...], fcwh_ref[...], preferred_element_type=f32)
                     + jnp.dot(e_ref[...], fcwe_ref[...], preferred_element_type=f32)
                     + fcb_ref[...])


def decoder_setup(params, encoder_outputs, mask):
    """One-time preprocessing (weights + encoder stream). Returns a jitted
    step(x_ids, hidden, cell) -> (prediction, hidden, cell) to call per token."""
    (emb, wh, we, ba, v, wih, whh, bl, fcw, fcb) = params
    f32, bf16 = jnp.float32, jnp.bfloat16

    B, S = mask.shape
    H = wh.shape[0]
    E = emb.shape[1]
    V = fcw.shape[1]

    # ---- tiling ---------------------------------------------------------------
    TB = min(128, _round_up(max(B, 1), 8))            # batch tile (MXU M dim)
    if B >= 16:                                       # >=2 batch tiles -> both v7x TCs
        TB = min(TB, _round_up((B + 1) // 2, 8))
    Bp = _round_up(B, TB)
    nb = Bp // TB

    SC = min(256, _round_up(S, 8))                    # in-kernel S chunk
    Sp = _round_up(S, SC)

    TV = min(2048, _round_up(V, 128))                 # vocab tile (lane-dense)
    Vp = _round_up(V, TV)
    nv = Vp // TV

    # ---- one-time weight prep (casts, pads, concat-splits) ---------------------
    emb_b = emb.astype(bf16)                          # embedding gathered in bf16
    wh_b = wh.astype(bf16)
    we_b = we.astype(bf16)
    ba_f = ba.reshape(1, H).astype(f32)
    v_row = v.reshape(1, H).astype(f32)
    wih_e = wih[:E].astype(bf16)                      # (E, 4H)
    wih_w = wih[E:].astype(bf16)                      # (H, 4H)
    whh_b = whh.astype(bf16)
    bl_f = bl.reshape(1, 4 * H).astype(f32)
    fcw_h = jnp.pad(fcw[:H], ((0, 0), (0, Vp - V))).astype(bf16)   # (H, Vp)
    fcw_e = jnp.pad(fcw[H:], ((0, 0), (0, Vp - V))).astype(bf16)   # (E, Vp)
    fcb_p = jnp.pad(fcb.reshape(1, V).astype(f32), ((0, 0), (0, Vp - V)))

    # ---- one-time encoder-stream prep ------------------------------------------
    enc = encoder_outputs[:, :, :H] + encoder_outputs[:, :, H:]    # bidirectional half-sum
    enc_p = jnp.pad(enc, ((0, Bp - B), (0, Sp - S), (0, 0))).astype(bf16)
    mbias = (mask.astype(f32) - 1.0) * 1e10                        # additive mask bias
    mbias_p = jnp.pad(mbias, ((0, Bp - B), (0, Sp - S)), constant_values=-1e10)

    # ---- block specs -------------------------------------------------------------
    def _blk_b(shape):                                # batch-tiled, vocab-invariant
        nd = len(shape) - 1
        return pl.BlockSpec((TB,) + tuple(shape[1:]),
                            lambda b, vv, _nd=nd: (b,) + (0,) * _nd)

    def _blk_w(shape):                                # constant weight slab
        nd = len(shape)
        return pl.BlockSpec(tuple(shape), lambda b, vv, _nd=nd: (0,) * _nd)

    def _blk_v(rows):                                 # vocab-tiled weight slab
        return pl.BlockSpec((rows, TV), lambda b, vv: (0, vv))

    in_specs = [
        _blk_b((Bp, E)), _blk_b((Bp, H)), _blk_b((Bp, H)),
        _blk_b((Bp, Sp, H)), _blk_b((Bp, Sp)),
        _blk_w((H, H)), _blk_w((H, H)), _blk_w((1, H)), _blk_w((1, H)),
        _blk_w((E, 4 * H)), _blk_w((H, 4 * H)), _blk_w((H, 4 * H)), _blk_w((1, 4 * H)),
        _blk_v(H), _blk_v(E), _blk_v(1),
    ]
    out_specs = (
        pl.BlockSpec((TB, TV), lambda b, vv: (b, vv)),
        pl.BlockSpec((TB, H), lambda b, vv: (b, 0)),
        pl.BlockSpec((TB, H), lambda b, vv: (b, 0)),
    )
    out_shape = (
        jax.ShapeDtypeStruct((Bp, Vp), f32),
        jax.ShapeDtypeStruct((Bp, H), f32),
        jax.ShapeDtypeStruct((Bp, H), f32),
    )

    # explicit scoped-VMEM budget: double-buffered blocks + scratch + S-chunk temps
    blk_list = [
        ((TB, E), bf16), ((TB, H), f32), ((TB, H), f32),
        ((TB, Sp, H), bf16), ((TB, Sp), f32),
        ((H, H), bf16), ((H, H), bf16), ((1, H), f32), ((1, H), f32),
        ((E, 4 * H), bf16), ((H, 4 * H), bf16), ((H, 4 * H), bf16), ((1, 4 * H), f32),
        ((H, TV), bf16), ((E, TV), bf16), ((1, TV), f32),
        ((TB, TV), f32), ((TB, H), f32), ((TB, H), f32),
    ]
    est = (2 * sum(_nbytes(s, d) for s, d in blk_list)
           + _nbytes((TB, H), bf16)
           + 6 * _nbytes((TB, SC, H), f32))
    vmem_limit = int(min(64 << 20, max(32 << 20, 1.25 * est + (2 << 20))))

    call = pl.pallas_call(
        functools.partial(decoder_kernel, s_chunk=SC),
        out_shape=out_shape,
        grid=(nb, nv),
        in_specs=in_specs,
        out_specs=out_specs,
        scratch_shapes=[pltpu.VMEM((TB, H), bf16)],
        compiler_params=pltpu.CompilerParams(
            dimension_semantics=("parallel", "arbitrary"),
            vmem_limit_bytes=vmem_limit),
    )

    def step(x_ids, hidden, cell):
        # per-token glue only: embedding gather (eval dropout == identity) + pads.
        # TODO(synk): multi-layer LSTM (num_layers > 1) not implemented; single layer only.
        e = jnp.take(emb_b, x_ids, axis=0)                          # (B, E) bf16
        e_p = jnp.pad(e, ((0, Bp - B), (0, 0)))
        h_p = jnp.pad(hidden[0].astype(f32), ((0, Bp - B), (0, 0)))
        c_p = jnp.pad(cell[0].astype(f32), ((0, Bp - B), (0, 0)))

        pred_p, h_out, c_out = call(
            e_p, h_p, c_p, enc_p, mbias_p,
            wh_b, we_b, ba_f, v_row,
            wih_e, wih_w, whh_b, bl_f,
            fcw_h, fcw_e, fcb_p)

        # matches torch: prediction, hidden.squeeze(0), cell.squeeze(0)
        return pred_p[:B, :V], h_out[:B], c_out[:B]

    return jax.jit(step)


def decoder_forward(x_ids, hidden, cell, encoder_outputs, mask, params):
    """Convenience single-shot wrapper (setup + one step). For autoregressive
    decoding call decoder_setup() once and reuse the returned step()."""
    return decoder_setup(params, encoder_outputs, mask)(x_ids, hidden, cell)


def decoder_reference(x_ids, hidden, cell, encoder_outputs, mask, params):
    """Plain-JAX reference mirroring the PyTorch forward (num_layers=1, eval)."""
    (emb, wh, we, ba, v, wih, whh, bl, fcw, fcb) = params
    H = hidden.shape[-1]
    enc = encoder_outputs[:, :, :H] + encoder_outputs[:, :, H:]      # (B, S, H)
    e = jnp.take(emb, x_ids, axis=0)                                 # (B, E)
    h = hidden[0]                                                    # (B, H)
    c = cell[0]

    energy = jnp.tanh(jnp.einsum("bh,hk->bk", h, wh)[:, None, :]
                      + jnp.einsum("bsh,hk->bsk", enc, we) + ba)     # (B, S, H)
    score = jnp.einsum("bsh,h->bs", energy, v[:, 0])                 # (B, S)
    score = jnp.where(mask == 0, -1e10, score)
    att = jax.nn.softmax(score, axis=1)                              # (B, S)
    weighted = jnp.einsum("bs,bsh->bh", att, enc)                    # (B, H)

    rnn_in = jnp.concatenate([e, weighted], axis=1)                  # (B, E+H)
    gates = rnn_in @ wih + h @ whh + bl                              # (B, 4H)
    i_g = jax.nn.sigmoid(gates[:, 0 * H:1 * H])
    f_g = jax.nn.sigmoid(gates[:, 1 * H:2 * H])
    g_g = jnp.tanh(gates[:, 2 * H:3 * H])
    o_g = jax.nn.sigmoid(gates[:, 3 * H:4 * H])
    c_new = f_g * c + i_g * g_g
    h_new = o_g * jnp.tanh(c_new)

    fc_in = jnp.concatenate([h_new * weighted, e], axis=1)
    pred = fc_in @ fcw + fcb
    return pred, h_new, c_new


if __name__ == "__main__":
    # small shapes: batch=2, src_len=8, emb=32, hidden=32, vocab=64, num_layers=1
    B, S, E, H, V = 2, 8, 32, 32, 64

    key = jax.random.PRNGKey(0)
    keys = jax.random.split(key, 16)

    # deterministic synthetic parameters
    emb = 0.1 * jax.random.normal(keys[0], (V, E), jnp.float32)      # embedding table
    wh = 0.1 * jax.random.normal(keys[1], (H, H), jnp.float32)       # attn W (hidden part)
    we = 0.1 * jax.random.normal(keys[2], (H, H), jnp.float32)       # attn W (encoder part)
    ba = 0.1 * jax.random.normal(keys[3], (1, H), jnp.float32)       # attn bias
    v = 0.1 * jax.random.normal(keys[4], (H, 1), jnp.float32)        # attn scoring vector
    wih = 0.1 * jax.random.normal(keys[5], (E + H, 4 * H), jnp.float32)  # LSTM W_ih^T
    whh = 0.1 * jax.random.normal(keys[6], (H, 4 * H), jnp.float32)      # LSTM W_hh^T
    bl = 0.1 * jax.random.normal(keys[7], (1, 4 * H), jnp.float32)       # b_ih + b_hh
    fcw = 0.1 * jax.random.normal(keys[8], (H + E, V), jnp.float32)      # fc W^T
    fcb = 0.1 * jax.random.normal(keys[9], (1, V), jnp.float32)          # fc bias
    params = (emb, wh, we, ba, v, wih, whh, bl, fcw, fcb)

    # deterministic inputs
    x_ids = jax.random.randint(keys[10], (B,), 0, V, dtype=jnp.int32)
    hidden = 0.5 * jax.random.normal(keys[11], (1, B, H), jnp.float32)
    cell = 0.5 * jax.random.normal(keys[12], (1, B, H), jnp.float32)
    encoder_outputs = jax.random.normal(keys[13], (B, S, 2 * H), jnp.float32)
    lengths = jnp.array([S, 5], dtype=jnp.int32)
    mask = (jnp.arange(S)[None, :] < lengths[:, None]).astype(jnp.float32)  # (B, S)

    # one-time setup, then a single per-token step (reusable autoregressively)
    step = decoder_setup(params, encoder_outputs, mask)
    pred, h_new, c_new = step(x_ids, hidden, cell)
    jax.block_until_ready((pred, h_new, c_new))

    ref_pred, ref_h, ref_c = decoder_reference(x_ids, hidden, cell,
                                               encoder_outputs, mask, params)
    # bf16 MXU operands + bf16 encoder stream + approx softmax reciprocal
    for got, want, name in ((pred, ref_pred, "prediction"),
                            (h_new, ref_h, "hidden"),
                            (c_new, ref_c, "cell")):
        err = float(jnp.max(jnp.abs(got - want)))
        assert err < 3e-2, f"{name} mismatch, max abs err = {err}"

    print("KERNEL_OK")
</pallas_src>

<mosaic_0001>
module attributes {stable_mosaic.version = 11 : i64} {
  func.func @decoder_kernel(%arg0: i32, %arg1: i32, %arg2: memref<8x32xbf16, #tpu.memory_space<vmem>>, %arg3: memref<8x32xf32, #tpu.memory_space<vmem>>, %arg4: memref<8x32xf32, #tpu.memory_space<vmem>>, %arg5: memref<8x8x32xbf16, #tpu.memory_space<vmem>>, %arg6: memref<8x8xf32, #tpu.memory_space<vmem>>, %arg7: memref<32x32xbf16, #tpu.memory_space<vmem>>, %arg8: memref<32x32xbf16, #tpu.memory_space<vmem>>, %arg9: memref<1x32xf32, #tpu.memory_space<vmem>>, %arg10: memref<1x32xf32, #tpu.memory_space<vmem>>, %arg11: memref<32x128xbf16, #tpu.memory_space<vmem>>, %arg12: memref<32x128xbf16, #tpu.memory_space<vmem>>, %arg13: memref<32x128xbf16, #tpu.memory_space<vmem>>, %arg14: memref<1x128xf32, #tpu.memory_space<vmem>>, %arg15: memref<32x128xbf16, #tpu.memory_space<vmem>>, %arg16: memref<32x128xbf16, #tpu.memory_space<vmem>>, %arg17: memref<1x128xf32, #tpu.memory_space<vmem>>, %arg18: memref<8x128xf32, #tpu.memory_space<vmem>>, %arg19: memref<8x32xf32, #tpu.memory_space<vmem>>, %arg20: memref<8x32xf32, #tpu.memory_space<vmem>>, %arg21: memref<8x32xbf16, #tpu.memory_space<vmem>>) attributes {dimension_semantics = [#tpu.dimension_semantics<parallel>, #tpu.dimension_semantics<arbitrary>], iteration_bounds = array<i64: 1, 1>, scalar_prefetch = 0 : i64, scratch_operands = 1 : i64, tpu.core_type = #tpu.core_type<tc>, window_params = [{transform_indices = @transform_0, window_bounds = array<i64: 8, 32>}, {transform_indices = @transform_1, window_bounds = array<i64: 8, 32>}, {transform_indices = @transform_2, window_bounds = array<i64: 8, 32>}, {transform_indices = @transform_3, window_bounds = array<i64: 8, 8, 32>}, {transform_indices = @transform_4, window_bounds = array<i64: 8, 8>}, {pipeline_mode = #tpu.pipeline_mode<synchronous>, transform_indices = @transform_5, window_bounds = array<i64: 32, 32>}, {pipeline_mode = #tpu.pipeline_mode<synchronous>, transform_indices = @transform_6, window_bounds = array<i64: 32, 32>}, {pipeline_mode = #tpu.pipeline_mode<synchronous>, transform_indices = @transform_7, window_bounds = array<i64: 1, 32>}, {pipeline_mode = #tpu.pipeline_mode<synchronous>, transform_indices = @transform_8, window_bounds = array<i64: 1, 32>}, {pipeline_mode = #tpu.pipeline_mode<synchronous>, transform_indices = @transform_9, window_bounds = array<i64: 32, 128>}, {pipeline_mode = #tpu.pipeline_mode<synchronous>, transform_indices = @transform_10, window_bounds = array<i64: 32, 128>}, {pipeline_mode = #tpu.pipeline_mode<synchronous>, transform_indices = @transform_11, window_bounds = array<i64: 32, 128>}, {pipeline_mode = #tpu.pipeline_mode<synchronous>, transform_indices = @transform_12, window_bounds = array<i64: 1, 128>}, {transform_indices = @transform_13, window_bounds = array<i64: 32, 128>}, {transform_indices = @transform_14, window_bounds = array<i64: 32, 128>}, {transform_indices = @transform_15, window_bounds = array<i64: 1, 128>}, {transform_indices = @transform_16, window_bounds = array<i64: 8, 128>}, {transform_indices = @transform_17, window_bounds = array<i64: 8, 32>}, {transform_indices = @transform_18, window_bounds = array<i64: 8, 32>}]} {
    %c0_i32 = arith.constant 0 : i32
    %0 = arith.cmpi eq, %arg1, %c0_i32 : i32
    %1 = arith.extui %0 : i1 to i32
    %c0_i32_0 = arith.constant 0 : i32
    %2 = arith.cmpi ne, %1, %c0_i32_0 : i32
    scf.if %2 {
      %c0_13 = arith.constant 0 : index
      %c0_14 = arith.constant 0 : index
      %14 = vector.load %arg2[%c0_13, %c0_14] : memref<8x32xbf16, #tpu.memory_space<vmem>>, vector<8x32xbf16>
      %c0_15 = arith.constant 0 : index
      %c0_16 = arith.constant 0 : index
      %15 = vector.load %arg3[%c0_15, %c0_16] : memref<8x32xf32, #tpu.memory_space<vmem>>, vector<8x32xf32>
      %c0_17 = arith.constant 0 : index
      %c0_18 = arith.constant 0 : index
      %16 = vector.load %arg4[%c0_17, %c0_18] : memref<8x32xf32, #tpu.memory_space<vmem>>, vector<8x32xf32>
      %17 = arith.truncf %15 : vector<8x32xf32> to vector<8x32xbf16>
      %c0_19 = arith.constant 0 : index
      %c0_20 = arith.constant 0 : index
      %18 = vector.load %arg7[%c0_19, %c0_20] : memref<32x32xbf16, #tpu.memory_space<vmem>>, vector<32x32xbf16>
      %cst_21 = arith.constant dense<0.000000e+00> : vector<8x32xf32>
      %19 = tpu.matmul %17, %18, %cst_21 {dimension_numbers = #tpu.dot_dimension_numbers<[1], [0], [0], [1], [0, 0, 1, 1], [], []>} : vector<8x32xbf16>, vector<32x32xbf16>, vector<8x32xf32> -> vector<8x32xf32>
      %c0_22 = arith.constant 0 : index
      %c0_23 = arith.constant 0 : index
      %20 = vector.load %arg9[%c0_22, %c0_23] : memref<1x32xf32, #tpu.memory_space<vmem>>, vector<1x32xf32>
      %21 = vector.broadcast %20 : vector<1x32xf32> to vector<8x32xf32>
      %22 = arith.addf %19, %21 : vector<8x32xf32>
      %c0_24 = arith.constant 0 : index
      %c0_25 = arith.constant 0 : index
      %23 = vector.load %arg10[%c0_24, %c0_25] : memref<1x32xf32, #tpu.memory_space<vmem>>, vector<1x32xf32>
      %cst_26 = arith.constant 0xFF800000 : f32
      %24 = vector.broadcast %cst_26 : f32 to vector<8x1xf32>
      %cst_27 = arith.constant 0.000000e+00 : f32
      %25 = vector.broadcast %cst_27 : f32 to vector<8x1xf32>
      %cst_28 = arith.constant 0.000000e+00 : f32
      %26 = vector.broadcast %cst_28 : f32 to vector<8x32xf32>
      %c0_29 = arith.constant 0 : index
      %c0_30 = arith.constant 0 : index
      %c0_31 = arith.constant 0 : index
      %27 = vector.load %arg5[%c0_29, %c0_30, %c0_31] : memref<8x8x32xbf16, #tpu.memory_space<vmem>>, vector<8x8x32xbf16>
      %28 = vector.shape_cast %27 : vector<8x8x32xbf16> to vector<64x32xbf16>
      %c0_32 = arith.constant 0 : index
      %c0_33 = arith.constant 0 : index
      %29 = vector.load %arg8[%c0_32, %c0_33] : memref<32x32xbf16, #tpu.memory_space<vmem>>, vector<32x32xbf16>
      %cst_34 = arith.constant dense<0.000000e+00> : vector<64x32xf32>
      %30 = tpu.matmul %28, %29, %cst_34 {dimension_numbers = #tpu.dot_dimension_numbers<[1], [0], [0], [1], [0, 0, 1, 1], [], []>} : vector<64x32xbf16>, vector<32x32xbf16>, vector<64x32xf32> -> vector<64x32xf32>
      %31 = vector.shape_cast %30 : vector<64x32xf32> to vector<8x8x32xf32>
      %32 = vector.shape_cast %22 : vector<8x32xf32> to vector<8x1x32xf32>
      %33 = vector.broadcast %32 : vector<8x1x32xf32> to vector<8x8x32xf32>
      %34 = arith.addf %31, %33 : vector<8x8x32xf32>
      %35 = math.tanh %34 : vector<8x8x32xf32>
      %36 = vector.shape_cast %23 : vector<1x32xf32> to vector<1x1x32xf32>
      %37 = vector.broadcast %36 : vector<1x1x32xf32> to vector<8x8x32xf32>
      %38 = arith.mulf %35, %37 : vector<8x8x32xf32>
      %cst_35 = arith.constant dense<0.000000e+00> : vector<8x8xf32>
      %39 = vector.multi_reduction <add>, %38, %cst_35 [2] : vector<8x8x32xf32> to vector<8x8xf32>
      %c0_36 = arith.constant 0 : index
      %c0_37 = arith.constant 0 : index
      %40 = vector.load %arg6[%c0_36, %c0_37] : memref<8x8xf32, #tpu.memory_space<vmem>>, vector<8x8xf32>
      %41 = arith.addf %39, %40 : vector<8x8xf32>
      %cst_38 = arith.constant dense<0xFF800000> : vector<8xf32>
      %42 = vector.multi_reduction <maximumf>, %41, %cst_38 [1] : vector<8x8xf32> to vector<8xf32>
      %43 = vector.shape_cast %42 : vector<8xf32> to vector<8x1xf32>
      %44 = arith.maximumf %24, %43 : vector<8x1xf32>
      %45 = arith.subf %24, %44 : vector<8x1xf32>
      %46 = math.exp %45 : vector<8x1xf32>
      %47 = vector.broadcast %44 : vector<8x1xf32> to vector<8x8xf32>
      %48 = arith.subf %41, %47 : vector<8x8xf32>
      %49 = math.exp %48 : vector<8x8xf32>
      %50 = arith.mulf %46, %25 : vector<8x1xf32>
      %cst_39 = arith.constant dense<0.000000e+00> : vector<8xf32>
      %51 = vector.multi_reduction <add>, %49, %cst_39 [1] : vector<8x8xf32> to vector<8xf32>
      %52 = vector.shape_cast %51 : vector<8xf32> to vector<8x1xf32>
      %53 = arith.addf %50, %52 : vector<8x1xf32>
      %54 = vector.broadcast %46 : vector<8x1xf32> to vector<8x32xf32>
      %55 = arith.mulf %54, %26 : vector<8x32xf32>
      %56 = vector.shape_cast %49 : vector<8x8xf32> to vector<8x8x1xf32>
      %57 = arith.extf %27 : vector<8x8x32xbf16> to vector<8x8x32xf32>
      %58 = vector.broadcast %56 : vector<8x8x1xf32> to vector<8x8x32xf32>
      %59 = arith.mulf %58, %57 : vector<8x8x32xf32>
      %cst_40 = arith.constant dense<0.000000e+00> : vector<8x32xf32>
      %60 = vector.multi_reduction <add>, %59, %cst_40 [1] : vector<8x8x32xf32> to vector<8x32xf32>
      %61 = arith.addf %55, %60 : vector<8x32xf32>
      %62 = tpu.reciprocal %53 {approx = true} : vector<8x1xf32> -> vector<8x1xf32>
      %63 = vector.broadcast %62 : vector<8x1xf32> to vector<8x32xf32>
      %64 = arith.mulf %61, %63 : vector<8x32xf32>
      %65 = arith.truncf %64 : vector<8x32xf32> to vector<8x32xbf16>
      %c0_41 = arith.constant 0 : index
      %c0_42 = arith.constant 0 : index
      %66 = vector.load %arg11[%c0_41, %c0_42] : memref<32x128xbf16, #tpu.memory_space<vmem>>, vector<32x128xbf16>
      %cst_43 = arith.constant dense<0.000000e+00> : vector<8x128xf32>
      %67 = tpu.matmul %14, %66, %cst_43 {dimension_numbers = #tpu.dot_dimension_numbers<[1], [0], [0], [1], [0, 0, 1, 1], [], []>} : vector<8x32xbf16>, vector<32x128xbf16>, vector<8x128xf32> -> vector<8x128xf32>
      %c0_44 = arith.constant 0 : index
      %c0_45 = arith.constant 0 : index
      %68 = vector.load %arg12[%c0_44, %c0_45] : memref<32x128xbf16, #tpu.memory_space<vmem>>, vector<32x128xbf16>
      %cst_46 = arith.constant dense<0.000000e+00> : vector<8x128xf32>
      %69 = tpu.matmul %65, %68, %cst_46 {dimension_numbers = #tpu.dot_dimension_numbers<[1], [0], [0], [1], [0, 0, 1, 1], [], []>} : vector<8x32xbf16>, vector<32x128xbf16>, vector<8x128xf32> -> vector<8x128xf32>
      %70 = arith.addf %67, %69 : vector<8x128xf32>
      %c0_47 = arith.constant 0 : index
      %c0_48 = arith.constant 0 : index
      %71 = vector.load %arg13[%c0_47, %c0_48] : memref<32x128xbf16, #tpu.memory_space<vmem>>, vector<32x128xbf16>
      %cst_49 = arith.constant dense<0.000000e+00> : vector<8x128xf32>
      %72 = tpu.matmul %17, %71, %cst_49 {dimension_numbers = #tpu.dot_dimension_numbers<[1], [0], [0], [1], [0, 0, 1, 1], [], []>} : vector<8x32xbf16>, vector<32x128xbf16>, vector<8x128xf32> -> vector<8x128xf32>
      %73 = arith.addf %70, %72 : vector<8x128xf32>
      %c0_50 = arith.constant 0 : index
      %c0_51 = arith.constant 0 : index
      %74 = vector.load %arg14[%c0_50, %c0_51] : memref<1x128xf32, #tpu.memory_space<vmem>>, vector<1x128xf32>
      %75 = vector.broadcast %74 : vector<1x128xf32> to vector<8x128xf32>
      %76 = arith.addf %73, %75 : vector<8x128xf32>
      %77 = vector.extract_strided_slice %76 {offsets = [0, 0], sizes = [8, 32], strides = [1, 1]} : vector<8x128xf32> to vector<8x32xf32>
      %cst_52 = arith.constant 5.000000e-01 : f32
      %78 = vector.broadcast %cst_52 : f32 to vector<8x32xf32>
      %79 = arith.mulf %78, %77 : vector<8x32xf32>
      %80 = math.tanh %79 : vector<8x32xf32>
      %cst_53 = arith.constant 1.000000e+00 : f32
      %81 = vector.broadcast %cst_53 : f32 to vector<8x32xf32>
      %82 = arith.addf %80, %81 : vector<8x32xf32>
      %cst_54 = arith.constant 5.000000e-01 : f32
      %83 = vector.broadcast %cst_54 : f32 to vector<8x32xf32>
      %84 = arith.mulf %83, %82 : vector<8x32xf32>
      %85 = vector.extract_strided_slice %76 {offsets = [0, 32], sizes = [8, 32], strides = [1, 1]} : vector<8x128xf32> to vector<8x32xf32>
      %cst_55 = arith.constant 5.000000e-01 : f32
      %86 = vector.broadcast %cst_55 : f32 to vector<8x32xf32>
      %87 = arith.mulf %86, %85 : vector<8x32xf32>
      %88 = math.tanh %87 : vector<8x32xf32>
      %cst_56 = arith.constant 1.000000e+00 : f32
      %89 = vector.broadcast %cst_56 : f32 to vector<8x32xf32>
      %90 = arith.addf %88, %89 : vector<8x32xf32>
      %cst_57 = arith.constant 5.000000e-01 : f32
      %91 = vector.broadcast %cst_57 : f32 to vector<8x32xf32>
      %92 = arith.mulf %91, %90 : vector<8x32xf32>
      %93 = vector.extract_strided_slice %76 {offsets = [0, 64], sizes = [8, 32], strides = [1, 1]} : vector<8x128xf32> to vector<8x32xf32>
      %94 = math.tanh %93 : vector<8x32xf32>
      %95 = vector.extract_strided_slice %76 {offsets = [0, 96], sizes = [8, 32], strides = [1, 1]} : vector<8x128xf32> to vector<8x32xf32>
      %cst_58 = arith.constant 5.000000e-01 : f32
      %96 = vector.broadcast %cst_58 : f32 to vector<8x32xf32>
      %97 = arith.mulf %96, %95 : vector<8x32xf32>
      %98 = math.tanh %97 : vector<8x32xf32>
      %cst_59 = arith.constant 1.000000e+00 : f32
      %99 = vector.broadcast %cst_59 : f32 to vector<8x32xf32>
      %100 = arith.addf %98, %99 : vector<8x32xf32>
      %cst_60 = arith.constant 5.000000e-01 : f32
      %101 = vector.broadcast %cst_60 : f32 to vector<8x32xf32>
      %102 = arith.mulf %101, %100 : vector<8x32xf32>
      %103 = arith.mulf %92, %16 : vector<8x32xf32>
      %104 = arith.mulf %84, %94 : vector<8x32xf32>
      %105 = arith.addf %103, %104 : vector<8x32xf32>
      %106 = math.tanh %105 : vector<8x32xf32>
      %107 = arith.mulf %102, %106 : vector<8x32xf32>
      %c0_61 = arith.constant 0 : index
      %c0_62 = arith.constant 0 : index
      %108 = vector.load %arg19[%c0_61, %c0_62] : memref<8x32xf32, #tpu.memory_space<vmem>>, vector<8x32xf32>
      tpu.vector_store %arg19[%c0_61, %c0_62], %107 {strides = array<i32>} : memref<8x32xf32, #tpu.memory_space<vmem>>, vector<8x32xf32>,
      %c0_63 = arith.constant 0 : index
      %c0_64 = arith.constant 0 : index
      %109 = vector.load %arg20[%c0_63, %c0_64] : memref<8x32xf32, #tpu.memory_space<vmem>>, vector<8x32xf32>
      tpu.vector_store %arg20[%c0_63, %c0_64], %105 {strides = array<i32>} : memref<8x32xf32, #tpu.memory_space<vmem>>, vector<8x32xf32>,
      %110 = arith.mulf %107, %64 : vector<8x32xf32>
      %111 = arith.truncf %110 : vector<8x32xf32> to vector<8x32xbf16>
      %c0_65 = arith.constant 0 : index
      %c0_66 = arith.constant 0 : index
      %112 = vector.load %arg21[%c0_65, %c0_66] : memref<8x32xbf16, #tpu.memory_space<vmem>>, vector<8x32xbf16>
      tpu.vector_store %arg21[%c0_65, %c0_66], %111 {strides = array<i32>} : memref<8x32xbf16, #tpu.memory_space<vmem>>, vector<8x32xbf16>,
    } else {
    }
    %c0 = arith.constant 0 : index
    %c0_1 = arith.constant 0 : index
    %3 = vector.load %arg21[%c0, %c0_1] : memref<8x32xbf16, #tpu.memory_space<vmem>>, vector<8x32xbf16>
    %c0_2 = arith.constant 0 : index
    %c0_3 = arith.constant 0 : index
    %4 = vector.load %arg15[%c0_2, %c0_3] : memref<32x128xbf16, #tpu.memory_space<vmem>>, vector<32x128xbf16>
    %cst = arith.constant dense<0.000000e+00> : vector<8x128xf32>
    %5 = tpu.matmul %3, %4, %cst {dimension_numbers = #tpu.dot_dimension_numbers<[1], [0], [0], [1], [0, 0, 1, 1], [], []>} : vector<8x32xbf16>, vector<32x128xbf16>, vector<8x128xf32> -> vector<8x128xf32>
    %c0_4 = arith.constant 0 : index
    %c0_5 = arith.constant 0 : index
    %6 = vector.load %arg2[%c0_4, %c0_5] : memref<8x32xbf16, #tpu.memory_space<vmem>>, vector<8x32xbf16>
    %c0_6 = arith.constant 0 : index
    %c0_7 = arith.constant 0 : index
    %7 = vector.load %arg16[%c0_6, %c0_7] : memref<32x128xbf16, #tpu.memory_space<vmem>>, vector<32x128xbf16>
    %cst_8 = arith.constant dense<0.000000e+00> : vector<8x128xf32>
    %8 = tpu.matmul %6, %7, %cst_8 {dimension_numbers = #tpu.dot_dimension_numbers<[1], [0], [0], [1], [0, 0, 1, 1], [], []>} : vector<8x32xbf16>, vector<32x128xbf16>, vector<8x128xf32> -> vector<8x128xf32>
    %9 = arith.addf %5, %8 : vector<8x128xf32>
    %c0_9 = arith.constant 0 : index
    %c0_10 = arith.constant 0 : index
    %10 = vector.load %arg17[%c0_9, %c0_10] : memref<1x128xf32, #tpu.memory_space<vmem>>, vector<1x128xf32>
    %11 = vector.broadcast %10 : vector<1x128xf32> to vector<8x128xf32>
    %12 = arith.addf %9, %11 : vector<8x128xf32>
    %c0_11 = arith.constant 0 : index
    %c0_12 = arith.constant 0 : index
    %13 = vector.load %arg18[%c0_11, %c0_12] : memref<8x128xf32, #tpu.memory_space<vmem>>, vector<8x128xf32>
    tpu.vector_store %arg18[%c0_11, %c0_12], %12 {strides = array<i32>} : memref<8x128xf32, #tpu.memory_space<vmem>>, vector<8x128xf32>,
    return
  }
  func.func @transform_0(%arg0: i32, %arg1: i32) -> (i32, i32) {
    %c0_i32 = arith.constant 0 : i32
    %c0_i32_0 = arith.constant 0 : i32
    return %arg0, %c0_i32 : i32, i32
  }
  func.func @transform_1(%arg0: i32, %arg1: i32) -> (i32, i32) {
    %c0_i32 = arith.constant 0 : i32
    %c0_i32_0 = arith.constant 0 : i32
    return %arg0, %c0_i32 : i32, i32
  }
  func.func @transform_2(%arg0: i32, %arg1: i32) -> (i32, i32) {
    %c0_i32 = arith.constant 0 : i32
    %c0_i32_0 = arith.constant 0 : i32
    return %arg0, %c0_i32 : i32, i32
  }
  func.func @transform_3(%arg0: i32, %arg1: i32) -> (i32, i32, i32) {
    %c0_i32 = arith.constant 0 : i32
    %c0_i32_0 = arith.constant 0 : i32
    %c0_i32_1 = arith.constant 0 : i32
    return %arg0, %c0_i32, %c0_i32_0 : i32, i32, i32
  }
  func.func @transform_4(%arg0: i32, %arg1: i32) -> (i32, i32) {
    %c0_i32 = arith.constant 0 : i32
    %c0_i32_0 = arith.constant 0 : i32
    return %arg0, %c0_i32 : i32, i32
  }
  func.func @transform_5(%arg0: i32, %arg1: i32) -> (i32, i32) {
    %c0_i32 = arith.constant 0 : i32
    %c0_i32_0 = arith.constant 0 : i32
    %c0_i32_1 = arith.constant 0 : i32
    return %c0_i32, %c0_i32_0 : i32, i32
  }
  func.func @transform_6(%arg0: i32, %arg1: i32) -> (i32, i32) {
    %c0_i32 = arith.constant 0 : i32
    %c0_i32_0 = arith.constant 0 : i32
    %c0_i32_1 = arith.constant 0 : i32
    return %c0_i32, %c0_i32_0 : i32, i32
  }
  func.func @transform_7(%arg0: i32, %arg1: i32) -> (i32, i32) {
    %c0_i32 = arith.constant 0 : i32
    %c0_i32_0 = arith.constant 0 : i32
    %c0_i32_1 = arith.constant 0 : i32
    return %c0_i32, %c0_i32_0 : i32, i32
  }
  func.func @transform_8(%arg0: i32, %arg1: i32) -> (i32, i32) {
    %c0_i32 = arith.constant 0 : i32
    %c0_i32_0 = arith.constant 0 : i32
    %c0_i32_1 = arith.constant 0 : i32
    return %c0_i32, %c0_i32_0 : i32, i32
  }
  func.func @transform_9(%arg0: i32, %arg1: i32) -> (i32, i32) {
    %c0_i32 = arith.constant 0 : i32
    %c0_i32_0 = arith.constant 0 : i32
    %c0_i32_1 = arith.constant 0 : i32
    return %c0_i32, %c0_i32_0 : i32, i32
  }
  func.func @transform_10(%arg0: i32, %arg1: i32) -> (i32, i32) {
    %c0_i32 = arith.constant 0 : i32
    %c0_i32_0 = arith.constant 0 : i32
    %c0_i32_1 = arith.constant 0 : i32
    return %c0_i32, %c0_i32_0 : i32, i32
  }
  func.func @transform_11(%arg0: i32, %arg1: i32) -> (i32, i32) {
    %c0_i32 = arith.constant 0 : i32
    %c0_i32_0 = arith.constant 0 : i32
    %c0_i32_1 = arith.constant 0 : i32
    return %c0_i32, %c0_i32_0 : i32, i32
  }
  func.func @transform_12(%arg0: i32, %arg1: i32) -> (i32, i32) {
    %c0_i32 = arith.constant 0 : i32
    %c0_i32_0 = arith.constant 0 : i32
    %c0_i32_1 = arith.constant 0 : i32
    return %c0_i32, %c0_i32_0 : i32, i32
  }
  func.func @transform_13(%arg0: i32, %arg1: i32) -> (i32, i32) {
    %c0_i32 = arith.constant 0 : i32
    %c0_i32_0 = arith.constant 0 : i32
    return %c0_i32, %arg1 : i32, i32
  }
  func.func @transform_14(%arg0: i32, %arg1: i32) -> (i32, i32) {
    %c0_i32 = arith.constant 0 : i32
    %c0_i32_0 = arith.constant 0 : i32
    return %c0_i32, %arg1 : i32, i32
  }
  func.func @transform_15(%arg0: i32, %arg1: i32) -> (i32, i32) {
    %c0_i32 = arith.constant 0 : i32
    %c0_i32_0 = arith.constant 0 : i32
    return %c0_i32, %arg1 : i32, i32
  }
  func.func @transform_16(%arg0: i32, %arg1: i32) -> (i32, i32) {
    %c0_i32 = arith.constant 0 : i32
    return %arg0, %arg1 : i32, i32
  }
  func.func @transform_17(%arg0: i32, %arg1: i32) -> (i32, i32) {
    %c0_i32 = arith.constant 0 : i32
    %c0_i32_0 = arith.constant 0 : i32
    return %arg0, %c0_i32 : i32, i32
  }
  func.func @transform_18(%arg0: i32, %arg1: i32) -> (i32, i32) {
    %c0_i32 = arith.constant 0 : i32
    %c0_i32_0 = arith.constant 0 : i32
    return %arg0, %c0_i32 : i32, i32
  }
}

</mosaic_0001>

<llo_original>
// kernel: step.1
$region0: #{step.1}
  #allocation0 [shape = 'u32[]', space=smem, size = 0x4, offset = 0x4, fixed_abs, tag = 'smem constant byte address 0x4 - core index']
  #allocation1 [shape = 'u32[144,128]{1,0:T(1,128)}', space=vmem, size = 0x12000, scoped, tag = 'internal scratch']
  #allocation2 [shape = 'bf16[8,32]{1,0:T(8,128)(2,1)}', space=vmem, size = 0x800, scoped, tag = 'scratch operand']
  %s0 = inlined_call_operand.vmem [shape: bf16[8,32], index: 0, kind: input, shape index: {}]
  %s1 = inlined_call_operand.vmem [shape: f32[8,32], index: 1, kind: input, shape index: {}]
  %s2 = inlined_call_operand.vmem [shape: f32[8,32], index: 2, kind: input, shape index: {}]
  %s3 = inlined_call_operand.vmem [shape: bf16[8,8,32], index: 3, kind: input, shape index: {}]
  %s4 = inlined_call_operand.hbm [shape: f32[8,8], index: 4, kind: input, shape index: {}]
  %s5 = inlined_call_operand.hbm [shape: bf16[32,32], index: 5, kind: input, shape index: {}]
  %s6 = inlined_call_operand.vmem [shape: bf16[32,32], index: 6, kind: input, shape index: {}]
  %s7 = inlined_call_operand.hbm [shape: f32[1,32], index: 7, kind: input, shape index: {}]
  %s8 = inlined_call_operand.hbm [shape: f32[1,32], index: 8, kind: input, shape index: {}]
  %s9 = inlined_call_operand.vmem [shape: bf16[32,128], index: 9, kind: input, shape index: {}]
  %s10 = inlined_call_operand.vmem [shape: bf16[32,128], index: 10, kind: input, shape index: {}]
  %s11 = inlined_call_operand.vmem [shape: bf16[32,128], index: 11, kind: input, shape index: {}]
  %s12 = inlined_call_operand.vmem [shape: f32[1,128], index: 12, kind: input, shape index: {}]
  %s13 = inlined_call_operand.vmem [shape: bf16[32,128], index: 13, kind: input, shape index: {}]
  %s14 = inlined_call_operand.vmem [shape: bf16[32,128], index: 14, kind: input, shape index: {}]
  %s15 = inlined_call_operand.vmem [shape: f32[1,128], index: 15, kind: input, shape index: {}]
  %s16 = inlined_call_operand.vmem [shape: f32[8,128], index: 16, kind: output, shape index: {0}]
  %s17 = inlined_call_operand.vmem [shape: f32[8,32], index: 17, kind: output, shape index: {1}]
  %s18 = inlined_call_operand.vmem [shape: f32[8,32], index: 18, kind: output, shape index: {2}]
  %19 = xla_tuple %s16, %s17, %s18
  %s20 = sld [smem:[#allocation0]]
  $region110: #{step.1} parent=0
    _
  %s22 = ssub.s32 1, %s20
  %s23 = scalar_select 0, %s22, %s20
  $region1: #{step.1} parent=0
    #allocation3 [shape = 'u8[4096]{0}', space=vmem, size = 0x1000, scoped, tag = 'input window, operand 4, single buffered']
    #allocation4 [shape = 's32[1]{0}', space=sflag, size = 0x4, scoped, tag = 'scoped memory for step.1']
    #allocation5 [shape = 'u8[8192]{0}', space=vmem, size = 0x2000, scoped, tag = 'input window, operand 5, single buffered']
    #allocation6 [shape = 's32[1]{0}', space=sflag, size = 0x4, scoped, tag = 'scoped memory for step.1']
    #allocation7 [shape = 'u8[512]{0}', space=vmem, size = 0x400, scoped, tag = 'input window, operand 7, single buffered']
    #allocation8 [shape = 'u8[512]{0}', space=vmem, size = 0x400, scoped, tag = 'input window, operand 8, single buffered']
    #allocation9 [shape = 's32[1]{0}', space=sflag, size = 0x4, scoped, tag = 'scoped memory for step.1']
    %24 = vsyncpa [#allocation4], 0
    %25 = vsyncpa [#allocation6], 0
    %26 = vsyncpa [#allocation9], 0
    // Predicated region
    $region2: #{step.1} parent=1 // pred_check
      _
    $region3: #{step.1} parent=1 // pred_check_branch
      %28 = sbr.rel (0) target = $region5
    $region4: #{step.1} parent=1 // pred_region
      _
    $region5: #{step.1} parent=1 // pred_fallthru
      _
    // Predicated region
    $region6: #{step.1} parent=1 // pred_check
      _
    $region7: #{step.1} parent=1 // pred_check_branch
      %30 = sbr.rel (0) target = $region9
    $region8: #{step.1} parent=1 // pred_region
      _
    $region9: #{step.1} parent=1 // pred_fallthru
      _
    // Predicated region
    $region10: #{step.1} parent=1 // pred_check
      _
    $region11: #{step.1} parent=1 // pred_check_branch
      %32 = sbr.rel (0) target = $region13
    $region12: #{step.1} parent=1 // pred_region
      _
    $region13: #{step.1} parent=1 // pred_fallthru
      _
    // Predicated region
    $region14: #{step.1} parent=1 // pred_check
      _
    $region15: #{step.1} parent=1 // pred_check_branch
      %34 = sbr.rel (0) target = $region17
    $region16: #{step.1} parent=1 // pred_region
      _
    $region17: #{step.1} parent=1 // pred_fallthru
      _
    // Predicated region
    $region18: #{step.1} parent=1 // pred_check
      _
    $region19: #{step.1} parent=1 // pred_check_branch
      %36 = sbr.rel (0) target = $region21
    $region20: #{step.1} parent=1 // pred_region
      %s38 = ssub.s32 128, 128
      %39 = vsyncadd [#allocation4], %s38
      %s41 = sshll.u32 [#allocation3], 4
      %s42 = int_to_ptr.vmem [resolvable:$true] %s41
      %44 = dma.hbm_to_vmem [thread:$0]  %s4, 128, %s42, [#allocation4]
    $region21: #{step.1} parent=1 // pred_fallthru
      _
    // Predicated region
    $region22: #{step.1} parent=1 // pred_check
      _
    $region23: #{step.1} parent=1 // pred_check_branch
      %46 = sbr.rel (0) target = $region25
    $region24: #{step.1} parent=1 // pred_region
      %s48 = ssub.s32 256, 256
      %49 = vsyncadd [#allocation6], %s48
      %s50 = sshll.u32 [#allocation5], 4
      %s51 = int_to_ptr.vmem [resolvable:$true] %s50
      %56 = dma.hbm_to_vmem [thread:$0]  %s5, 256, %s51, [#allocation6], 64, 64, 4
    $region25: #{step.1} parent=1 // pred_fallthru
      _
    // Predicated region
    $region26: #{step.1} parent=1 // pred_check
      _
    $region27: #{step.1} parent=1 // pred_check_branch
      %58 = sbr.rel (0) target = $region29
    $region28: #{step.1} parent=1 // pred_region
      _
    $region29: #{step.1} parent=1 // pred_fallthru
      _
    // Predicated region
    $region30: #{step.1} parent=1 // pred_check
      _
    $region31: #{step.1} parent=1 // pred_check_branch
      %60 = sbr.rel (0) target = $region33
    $region32: #{step.1} parent=1 // pred_region
      %s62 = ssub.s32 16, 16
      %63 = vsyncadd [#allocation6], %s62
      %s65 = sshll.u32 [#allocation7], 4
      %s66 = int_to_ptr.vmem [resolvable:$true] %s65
      %68 = dma.hbm_to_vmem [thread:$0]  %s7, 16, %s66, [#allocation6]
    $region33: #{step.1} parent=1 // pred_fallthru
      _
    // Predicated region
    $region34: #{step.1} parent=1 // pred_check
      _
    $region35: #{step.1} parent=1 // pred_check_branch
      %70 = sbr.rel (0) target = $region37
    $region36: #{step.1} parent=1 // pred_region
      %s72 = ssub.s32 16, 16
      %73 = vsyncadd [#allocation9], %s72
      %s75 = sshll.u32 [#allocation8], 4
      %s76 = int_to_ptr.vmem [resolvable:$true] %s75
      %78 = dma.hbm_to_vmem [thread:$0]  %s8, 16, %s76, [#allocation9]
    $region37: #{step.1} parent=1 // pred_fallthru
      _
    // Predicated region
    $region38: #{step.1} parent=1 // pred_check
      _
    $region39: #{step.1} parent=1 // pred_check_branch
      %80 = sbr.rel (0) target = $region41
    $region40: #{step.1} parent=1 // pred_region
      _
    $region41: #{step.1} parent=1 // pred_fallthru
      _
    // Predicated region
    $region42: #{step.1} parent=1 // pred_check
      _
    $region43: #{step.1} parent=1 // pred_check_branch
      %82 = sbr.rel (0) target = $region45
    $region44: #{step.1} parent=1 // pred_region
      _
    $region45: #{step.1} parent=1 // pred_fallthru
      _
    // Predicated region
    $region46: #{step.1} parent=1 // pred_check
      _
    $region47: #{step.1} parent=1 // pred_check_branch
      %84 = sbr.rel (0) target = $region49
    $region48: #{step.1} parent=1 // pred_region
      _
    $region49: #{step.1} parent=1 // pred_fallthru
      _
    // Predicated region
    $region50: #{step.1} parent=1 // pred_check
      _
    $region51: #{step.1} parent=1 // pred_check_branch
      %86 = sbr.rel (0) target = $region53
    $region52: #{step.1} parent=1 // pred_region
      _
    $region53: #{step.1} parent=1 // pred_fallthru
      _
    // Predicated region
    $region54: #{step.1} parent=1 // pred_check
      _
    $region55: #{step.1} parent=1 // pred_check_branch
      %88 = sbr.rel (0) target = $region57
    $region56: #{step.1} parent=1 // pred_region
      _
    $region57: #{step.1} parent=1 // pred_fallthru
      _
    // Predicated region
    $region58: #{step.1} parent=1 // pred_check
      _
    $region59: #{step.1} parent=1 // pred_check_branch
      %90 = sbr.rel (0) target = $region61
    $region60: #{step.1} parent=1 // pred_region
      _
    $region61: #{step.1} parent=1 // pred_fallthru
      _
    // Predicated region
    $region62: #{step.1} parent=1 // pred_check
      _
    $region63: #{step.1} parent=1 // pred_check_branch
      %92 = sbr.rel (0) target = $region65
    $region64: #{step.1} parent=1 // pred_region
      _
    $region65: #{step.1} parent=1 // pred_fallthru
      _
    // Predicated region
    $region66: #{step.1} parent=1 // pred_check
      _
    $region67: #{step.1} parent=1 // pred_check_branch
      %94 = sbr.rel (0) target = $region69
    $region68: #{step.1} parent=1 // pred_region
      %95 = dma.done [#allocation4], 128
    $region69: #{step.1} parent=1 // pred_fallthru
      _
    // Predicated region
    $region70: #{step.1} parent=1 // pred_check
      _
    $region71: #{step.1} parent=1 // pred_check_branch
      %97 = sbr.rel (0) target = $region73
    $region72: #{step.1} parent=1 // pred_region
      %98 = dma.done [#allocation6], 256
    $region73: #{step.1} parent=1 // pred_fallthru
      _
    // Predicated region
    $region74: #{step.1} parent=1 // pred_check
      _
    $region75: #{step.1} parent=1 // pred_check_branch
      %100 = sbr.rel (0) target = $region77
    $region76: #{step.1} parent=1 // pred_region
      %101 = dma.done [#allocation6], 16
    $region77: #{step.1} parent=1 // pred_fallthru
      _
    // Predicated region
    $region78: #{step.1} parent=1 // pred_check
      _
    $region79: #{step.1} parent=1 // pred_check_branch
      %103 = sbr.rel (0) target = $region81
    $region80: #{step.1} parent=1 // pred_region
      %104 = dma.done [#allocation9], 16
    $region81: #{step.1} parent=1 // pred_fallthru
      _
    %p106 = scmp.eq.s32.totalorder 0, 0
    // Predicated region
    $region82: #{step.1} parent=1 // pred_check
      %p107 = pneg %p106
    $region83: #{step.1} parent=1 // pred_check_branch
      %109 = sbr.rel (%p107) target = $region85
    $region84: #{step.1} parent=1 // pred_region
      %v110 = vld [vmem:[%s0] sm:$0xf]
      %v111 = vld [vmem:[%s1] sm:$0xff]
      %v112 = vld [vmem:[%s2] sm:$0xff]
      %v113 = vpack.c.bf16 %v111, %v111
      %v114 = vld [vmem:[#allocation5] sm:$0xf]
      %v115 = vld [vmem:[#allocation5 + $0x4] sm:$0xf]
      %v116 = vld [vmem:[#allocation5 + $0x8] sm:$0xf]
      %v117 = vld [vmem:[#allocation5 + $0xc] sm:$0xf]
      %v118 = vld [vmem:[#allocation7] sm:$0x1]
      %v120 = vlaneseq
      %v121 = vshrl.u32 %v120, 7
      %v122 = vsub.s32 0, %v121
      %v123 = vrot.slane %v118, %v122
      %v129 = vunpack.c.l.b16 %v114
      %v130 = vunpack.c.l.b16 %v115
      %v131 = vunpack.c.l.b16 %v116
      %v132 = vunpack.c.l.b16 %v117
      %v133 = vpack.c.b16 %v130, %v129
      %v134 = vpack.c.b16 %v132, %v131
      %vm137 = vcmask 261120
      %v139 = vsel %vm137, %v113, 0
      %141 = vmatprep.subr.bf16.mxu0 0
      %142 = vmatpush1.bf16.msra.mxu0 %v133
      %143 = vmatprep.subr.bf16.mxu0 0
      %144 = vmatpush1.bf16.msra.mxu0 %v134
      %145 = vmatprep.subr.bf16.mxu0 0
      %146 = vmatpush1.bf16.msra.mxu0 0
      %147 = vmatprep.subr.bf16.mxu0 0
      %148 = vmatpush1.bf16.msra.mxu0 0
      %149 = vmatprep.subr.bf16.mxu0 0
      %150 = vmatpush1.bf16.msra.mxu0 0
      %151 = vmatprep.subr.bf16.mxu0 0
      %152 = vmatpush1.bf16.msra.mxu0 0
      %153 = vmatprep.subr.bf16.mxu0 0
      %154 = vmatpush1.bf16.msra.mxu0 0
      %155 = vmatprep.subr.bf16.mxu0 0
      %156 = vmatpush1.bf16.msra.mxu0 0
      %157 = vmatprep.subr.bf16.mxu0 0
      %158 = vmatpush1.bf16.msra.mxu0 0
      %159 = vmatprep.subr.bf16.mxu0 0
      %160 = vmatpush1.bf16.msra.mxu0 0
      %161 = vmatprep.subr.bf16.mxu0 0
      %162 = vmatpush1.bf16.msra.mxu0 0
      %163 = vmatprep.subr.bf16.mxu0 0
      %164 = vmatpush1.bf16.msra.mxu0 0
      %165 = vmatprep.subr.bf16.mxu0 0
      %166 = vmatpush1.bf16.msra.mxu0 0
      %167 = vmatprep.subr.bf16.mxu0 0
      %168 = vmatpush1.bf16.msra.mxu0 0
      %169 = vmatprep.subr.bf16.mxu0 0
      %170 = vmatpush1.bf16.msra.mxu0 0
      %171 = vmatprep.subr.bf16.mxu0 0
      %172 = vmatpush1.bf16.msra.mxu0 0
      %173 = vmatprep.mubr.bf16.mxu0 0
      %174 = vmatmul.mubr.bf16.gmra.mrb[0].mxu0 %v139
      %v175 = vpop.f32.mrb[0].mxu0
      %v176 = vadd.f32 %v123, %v175
      %v177 = vpop.f32.mrb[0].mxu0
      %v178 = vpop.f32.mrb[0].mxu0
      %v179 = vpop.f32.mrb[0].mxu0
      %180 = vdwg.mxu0
      %v181 = vld [vmem:[#allocation8] sm:$0x1]
      %v182 = vld [vmem:[%s3] sm:$0xf]
      %v183 = vld [vmem:[%s3 + $0x4] sm:$0xf]
      %v184 = vld [vmem:[%s3 + $0x8] sm:$0xf]
      %v185 = vld [vmem:[%s3 + $0xc] sm:$0xf]
      %v186 = vld [vmem:[%s3 + $0x10] sm:$0xf]
      %v187 = vld [vmem:[%s3 + $0x14] sm:$0xf]
      %v188 = vld [vmem:[%s3 + $0x18] sm:$0xf]
      %v189 = vld [vmem:[%s3 + $0x1c] sm:$0xf]
      %v190 = vld [vmem:[%s6] sm:$0xf]
      %v191 = vld [vmem:[%s6 + $0x4] sm:$0xf]
      %v192 = vld [vmem:[%s6 + $0x8] sm:$0xf]
      %v193 = vld [vmem:[%s6 + $0xc] sm:$0xf]
      %v202 = vunpack.c.l.b16 %v182
      %v203 = vunpack.c.l.b16 %v183
      %v204 = vunpack.c.l.b16 %v184
      %v205 = vunpack.c.l.b16 %v185
      %v206 = vunpack.c.l.b16 %v186
      %v207 = vunpack.c.l.b16 %v187
      %v208 = vunpack.c.l.b16 %v188
      %v209 = vunpack.c.l.b16 %v189
      %v210 = vpack.c.b16 %v203, %v202
      %v211 = vpack.c.b16 %v205, %v204
      %v212 = vpack.c.b16 %v207, %v206
      %v213 = vpack.c.b16 %v209, %v208
      %v218 = vunpack.c.l.b16 %v190
      %v219 = vunpack.c.l.b16 %v191
      %v220 = vunpack.c.l.b16 %v192
      %v221 = vunpack.c.l.b16 %v193
      %v222 = vpack.c.b16 %v219, %v218
      %v223 = vpack.c.b16 %v221, %v220
      %v227 = vsel %vm137, %v210, 0
      %v230 = vsel %vm137, %v211, 0
      %v233 = vsel %vm137, %v212, 0
      %v236 = vsel %vm137, %v213, 0
      %238 = vmatprep.subr.bf16.mxu0 0
      %239 = vmatpush1.bf16.msra.mxu0 %v222
      %240 = vmatprep.subr.bf16.mxu0 0
      %241 = vmatpush1.bf16.msra.mxu0 %v223
      %242 = vmatprep.subr.bf16.mxu0 0
      %243 = vmatpush1.bf16.msra.mxu0 0
      %244 = vmatprep.subr.bf16.mxu0 0
      %245 = vmatpush1.bf16.msra.mxu0 0
      %246 = vmatprep.subr.bf16.mxu0 0
      %247 = vmatpush1.bf16.msra.mxu0 0
      %248 = vmatprep.subr.bf16.mxu0 0
      %249 = vmatpush1.bf16.msra.mxu0 0
      %250 = vmatprep.subr.bf16.mxu0 0
      %251 = vmatpush1.bf16.msra.mxu0 0
      %252 = vmatprep.subr.bf16.mxu0 0
      %253 = vmatpush1.bf16.msra.mxu0 0
      %254 = vmatprep.subr.bf16.mxu0 0
      %255 = vmatpush1.bf16.msra.mxu0 0
      %256 = vmatprep.subr.bf16.mxu0 0
      %257 = vmatpush1.bf16.msra.mxu0 0
      %258 = vmatprep.subr.bf16.mxu0 0
      %259 = vmatpush1.bf16.msra.mxu0 0
      %260 = vmatprep.subr.bf16.mxu0 0
      %261 = vmatpush1.bf16.msra.mxu0 0
      %262 = vmatprep.subr.bf16.mxu0 0
      %263 = vmatpush1.bf16.msra.mxu0 0
      %264 = vmatprep.subr.bf16.mxu0 0
      %265 = vmatpush1.bf16.msra.mxu0 0
      %266 = vmatprep.subr.bf16.mxu0 0
      %267 = vmatpush1.bf16.msra.mxu0 0
      %268 = vmatprep.subr.bf16.mxu0 0
      %269 = vmatpush1.bf16.msra.mxu0 0
      %270 = vmatprep.mubr.bf16.mxu0 0
      %271 = vmatmul.mubr.bf16.gmra.mrb[0].mxu0 %v227
      %v272 = vpop.f32.mrb[0].mxu0
      %v273 = vadd.f32 0.0, %v272
      %v274 = vpop.f32.mrb[0].mxu0
      %v275 = vpop.f32.mrb[0].mxu0
      %v276 = vadd.f32 0.0, %v275
      %v277 = vpop.f32.mrb[0].mxu0
      %278 = vmatprep.mubr.bf16.mxu0 0
      %279 = vmatmul.mubr.bf16.gmra.mrb[0].mxu0 %v230
      %v280 = vpop.f32.mrb[0].mxu0
      %v281 = vadd.f32 0.0, %v280
      %v282 = vpop.f32.mrb[0].mxu0
      %v283 = vpop.f32.mrb[0].mxu0
      %v284 = vadd.f32 0.0, %v283
      %v285 = vpop.f32.mrb[0].mxu0
      %286 = vmatprep.mubr.bf16.mxu0 0
      %287 = vmatmul.mubr.bf16.gmra.mrb[0].mxu0 %v233
      %v288 = vpop.f32.mrb[0].mxu0
      %v289 = vadd.f32 0.0, %v288
      %v290 = vpop.f32.mrb[0].mxu0
      %v291 = vpop.f32.mrb[0].mxu0
      %v292 = vadd.f32 0.0, %v291
      %v293 = vpop.f32.mrb[0].mxu0
      %294 = vmatprep.mubr.bf16.mxu0 0
      %295 = vmatmul.mubr.bf16.gmra.mrb[0].mxu0 %v236
      %v296 = vpop.f32.mrb[0].mxu0
      %v297 = vadd.f32 0.0, %v296
      %v298 = vpop.f32.mrb[0].mxu0
      %v299 = vpop.f32.mrb[0].mxu0
      %v300 = vadd.f32 0.0, %v299
      %v301 = vpop.f32.mrb[0].mxu0
      %302 = vdwg.mxu0
      %v304 = vcombine.high %v176, %v176
      %v306 = vunpack.c.l.s4 1966171168
      %v307 = vunpack.c.0.s8 %v306
      %v308 = vlaneseq
      %v309 = vshrl.u32 %v308, 7
      %v310 = vsub.s32 %v307, %v309
      %v311 = vrot.slane %v176, %v310
      %v313 = vunpack.c.l.s4 1966171168
      %v314 = vunpack.c.0.s8 %v313
      %v315 = vlaneseq
      %v316 = vshrl.u32 %v315, 7
      %v317 = vsub.s32 %v314, %v316
      %v318 = vrot.slane %v304, %v317
      %v319 = vcombine.high %v311, %v311
      %v320 = vcombine.high %v318, %v318
      %v322 = vunpack.c.l.s4 1966171168
      %v323 = vunpack.c.0.s8 %v322
      %v324 = vlaneseq
      %v325 = vshrl.u32 %v324, 7
      %v326 = vsub.s32 %v323, %v325
      %v327 = vrot.slane %v311, %v326
      %v329 = vunpack.c.l.s4 1966171168
      %v330 = vunpack.c.0.s8 %v329
      %v331 = vlaneseq
      %v332 = vshrl.u32 %v331, 7
      %v333 = vsub.s32 %v330, %v332
      %v334 = vrot.slane %v318, %v333
      %v336 = vunpack.c.l.s4 1966171168
      %v337 = vunpack.c.0.s8 %v336
      %v338 = vlaneseq
      %v339 = vshrl.u32 %v338, 7
      %v340 = vsub.s32 %v337, %v339
      %v341 = vrot.slane %v319, %v340
      %v343 = vunpack.c.l.s4 1966171168
      %v344 = vunpack.c.0.s8 %v343
      %v345 = vlaneseq
      %v346 = vshrl.u32 %v345, 7
      %v347 = vsub.s32 %v344, %v346
      %v348 = vrot.slane %v320, %v347
      %v349 = vcombine.high %v327, %v327
      %v350 = vcombine.high %v334, %v334
      %v351 = vcombine.high %v341, %v341
      %v352 = vcombine.high %v348, %v348
      %v353 = vlaneseq
      %v354 = vshrl.u32 %v353, 7
      %v355 = vsub.s32 0, %v354
      %v356 = vrot.slane %v327, %v355
      %v357 = vlaneseq
      %v358 = vshrl.u32 %v357, 7
      %v359 = vsub.s32 0, %v358
      %v360 = vrot.slane %v341, %v359
      %v361 = vlaneseq
      %v362 = vshrl.u32 %v361, 7
      %v363 = vsub.s32 0, %v362
      %v364 = vrot.slane %v349, %v363
      %v365 = vlaneseq
      %v366 = vshrl.u32 %v365, 7
      %v367 = vsub.s32 0, %v366
      %v368 = vrot.slane %v351, %v367
      %v369 = vlaneseq
      %v370 = vshrl.u32 %v369, 7
      %v371 = vsub.s32 0, %v370
      %v372 = vrot.slane %v334, %v371
      %v373 = vlaneseq
      %v374 = vshrl.u32 %v373, 7
      %v375 = vsub.s32 0, %v374
      %v376 = vrot.slane %v348, %v375
      %v377 = vlaneseq
      %v378 = vshrl.u32 %v377, 7
      %v379 = vsub.s32 0, %v378
      %v380 = vrot.slane %v350, %v379
      %v381 = vlaneseq
      %v382 = vshrl.u32 %v381, 7
      %v383 = vsub.s32 0, %v382
      %v384 = vrot.slane %v352, %v383
      %v393 = vadd.f32 %v273, %v356
      %v394 = vadd.f32 %v276, %v360
      %v395 = vadd.f32 %v281, %v364
      %v396 = vadd.f32 %v284, %v368
      %v397 = vadd.f32 %v289, %v372
      %v398 = vadd.f32 %v292, %v376
      %v399 = vadd.f32 %v297, %v380
      %v400 = vadd.f32 %v300, %v384
      %v401 = vtanh.pop %v393
      %v402 = vtanh.pop %v394
      %v403 = vtanh.pop %v395
      %v404 = vtanh.pop %v396
      %v405 = vtanh.pop %v397
      %v406 = vtanh.pop %v398
      %v407 = vtanh.pop %v399
      %v408 = vtanh.pop %v400
      %v410 = vlaneseq
      %v411 = vshrl.u32 %v410, 7
      %v412 = vsub.s32 0, %v411
      %v413 = vrot.slane %v181, %v412
      %v415 = vmul.f32 %v401, %v413
      %v416 = vmul.f32 %v402, %v413
      %v417 = vmul.f32 %v403, %v413
      %v418 = vmul.f32 %v404, %v413
      %v419 = vmul.f32 %v405, %v413
      %v420 = vmul.f32 %v406, %v413
      %v421 = vmul.f32 %v407, %v413
      %v422 = vmul.f32 %v408, %v413
      %v423 = vsel %vm137, %v415, 0.0
      %424 = vadd.xlane.f32.xlu0 %v423
      %v425 = vpop.xlane.xlu0 %424
      %v426 = vsel %vm137, %v416, 0.0
      %427 = vadd.xlane.f32.xlu0 %v426
      %v428 = vpop.xlane.xlu0 %427
      %v429 = vsel %vm137, %v417, 0.0
      %430 = vadd.xlane.f32.xlu0 %v429
      %v431 = vpop.xlane.xlu0 %430
      %v432 = vsel %vm137, %v418, 0.0
      %433 = vadd.xlane.f32.xlu0 %v432
      %v434 = vpop.xlane.xlu0 %433
      %v435 = vsel %vm137, %v419, 0.0
      %436 = vadd.xlane.f32.xlu0 %v435
      %v437 = vpop.xlane.xlu0 %436
      %v438 = vsel %vm137, %v420, 0.0
      %439 = vadd.xlane.f32.xlu0 %v438
      %v440 = vpop.xlane.xlu0 %439
      %v441 = vsel %vm137, %v421, 0.0
      %442 = vadd.xlane.f32.xlu0 %v441
      %v443 = vpop.xlane.xlu0 %442
      %v444 = vsel %vm137, %v422, 0.0
      %445 = vadd.xlane.f32.xlu0 %v444
      %v446 = vpop.xlane.xlu0 %445
      %v447 = vld [vmem:[#allocation3] sm:$0xff]
      %v449 = vlaneseq
      %v450 = vshrl.u32 %v449, 7
      %v451 = vsub.s32 0, %v450
      %v452 = vrot.slane %v447, %v451
      %454 = vbcast.lane.b32.xlu0 %v452, 256
      %v455 = vpop.permute.xlu0 %454
      %v456 = vlaneseq
      %v457 = vshrl.u32 %v456, 7
      %v458 = vsub.s32 1, %v457
      %v459 = vrot.slane %v447, %v458
      %461 = vbcast.lane.b32.xlu0 %v459, 256
      %v462 = vpop.permute.xlu0 %461
      %v463 = vlaneseq
      %v464 = vshrl.u32 %v463, 7
      %v465 = vsub.s32 2, %v464
      %v466 = vrot.slane %v447, %v465
      %468 = vbcast.lane.b32.xlu0 %v466, 256
      %v469 = vpop.permute.xlu0 %468
      %v470 = vlaneseq
      %v471 = vshrl.u32 %v470, 7
      %v472 = vsub.s32 3, %v471
      %v473 = vrot.slane %v447, %v472
      %475 = vbcast.lane.b32.xlu0 %v473, 256
      %v476 = vpop.permute.xlu0 %475
      %v477 = vlaneseq
      %v478 = vshrl.u32 %v477, 7
      %v479 = vsub.s32 4, %v478
      %v480 = vrot.slane %v447, %v479
      %482 = vbcast.lane.b32.xlu0 %v480, 256
      %v483 = vpop.permute.xlu0 %482
      %v484 = vlaneseq
      %v485 = vshrl.u32 %v484, 7
      %v486 = vsub.s32 5, %v485
      %v487 = vrot.slane %v447, %v486
      %489 = vbcast.lane.b32.xlu0 %v487, 256
      %v490 = vpop.permute.xlu0 %489
      %v491 = vlaneseq
      %v492 = vshrl.u32 %v491, 7
      %v493 = vsub.s32 6, %v492
      %v494 = vrot.slane %v447, %v493
      %496 = vbcast.lane.b32.xlu0 %v494, 256
      %v497 = vpop.permute.xlu0 %496
      %v498 = vlaneseq
      %v499 = vshrl.u32 %v498, 7
      %v500 = vsub.s32 7, %v499
      %v501 = vrot.slane %v447, %v500
      %503 = vbcast.lane.b32.xlu0 %v501, 256
      %v504 = vpop.permute.xlu0 %503
      %v513 = vadd.f32 %v425, %v455
      %v514 = vadd.f32 %v428, %v462
      %v515 = vadd.f32 %v431, %v469
      %v516 = vadd.f32 %v434, %v476
      %v517 = vadd.f32 %v437, %v483
      %v518 = vadd.f32 %v440, %v490
      %v519 = vadd.f32 %v443, %v497
      %v520 = vadd.f32 %v446, %v504
      %529 = vset.pattern.permute.xlu0 0
      %530 = vperm.xlu0 %529, %v513
      %v531 = vpop.permute.xlu0 %530
      %532 = vset.pattern.permute.xlu0 0
      %533 = vperm.xlu0 %532, %v514
      %v534 = vpop.permute.xlu0 %533
      %535 = vset.pattern.permute.xlu0 0
      %536 = vperm.xlu0 %535, %v515
      %v537 = vpop.permute.xlu0 %536
      %538 = vset.pattern.permute.xlu0 0
      %539 = vperm.xlu0 %538, %v516
      %v540 = vpop.permute.xlu0 %539
      %541 = vset.pattern.permute.xlu0 0
      %542 = vperm.xlu0 %541, %v517
      %v543 = vpop.permute.xlu0 %542
      %544 = vset.pattern.permute.xlu0 0
      %545 = vperm.xlu0 %544, %v518
      %v546 = vpop.permute.xlu0 %545
      %547 = vset.pattern.permute.xlu0 0
      %548 = vperm.xlu0 %547, %v519
      %v549 = vpop.permute.xlu0 %548
      %550 = vset.pattern.permute.xlu0 0
      %551 = vperm.xlu0 %550, %v520
      %v552 = vpop.permute.xlu0 %551
      %v553 = vlaneseq
      %v554 = vand.u32 %v553, 127
      %v555 = vlaneseq
      %v556 = vshrl.u32 %v555, 7
      %v557 = vsub.s32 %v554, %v556
      %v558 = vrot.slane %v531, %v557
      %v559 = vlaneseq
      %v560 = vshrl.u32 %v559, 7
      %v561 = vsub.s32 %v554, %v560
      %v562 = vrot.slane %v534, %v561
      %v563 = vlaneseq
      %v564 = vshrl.u32 %v563, 7
      %v565 = vsub.s32 %v554, %v564
      %v566 = vrot.slane %v537, %v565
      %v567 = vlaneseq
      %v568 = vshrl.u32 %v567, 7
      %v569 = vsub.s32 %v554, %v568
      %v570 = vrot.slane %v540, %v569
      %v571 = vlaneseq
      %v572 = vshrl.u32 %v571, 7
      %v573 = vsub.s32 %v554, %v572
      %v574 = vrot.slane %v543, %v573
      %v575 = vlaneseq
      %v576 = vshrl.u32 %v575, 7
      %v577 = vsub.s32 %v554, %v576
      %v578 = vrot.slane %v546, %v577
      %v579 = vlaneseq
      %v580 = vshrl.u32 %v579, 7
      %v581 = vsub.s32 %v554, %v580
      %v582 = vrot.slane %v549, %v581
      %v583 = vlaneseq
      %v584 = vshrl.u32 %v583, 7
      %v585 = vsub.s32 %v554, %v584
      %v586 = vrot.slane %v552, %v585
      %vm587 = vcmask 1041409
      %v588 = vsel %vm587, %v562, %v558
      %vm589 = vcmask 1042434
      %v590 = vsel %vm589, %v566, %v588
      %vm591 = vcmask 1043459
      %v592 = vsel %vm591, %v570, %v590
      %vm593 = vcmask 1044484
      %v594 = vsel %vm593, %v574, %v592
      %vm595 = vcmask 1045509
      %v596 = vsel %vm595, %v578, %v594
      %vm597 = vcmask 1046534
      %v598 = vsel %vm597, %v582, %v596
      %vm599 = vcmask 1047559
      %v600 = vsel %vm599, %v586, %v598
      %vm602 = vcmask 64512
      %v603 = vsel %vm602, %v600, -inf
      %604 = vmax.xlane.f32.xlu0 %v603
      %v605 = vpop.xlane.xlu0 %604
      %v606 = vsub.f32 -inf, %v605
      %v607 = vmul.f32 %v606, 1.442695
      %v608 = vpow.pop %v607
      %v610 = vlaneseq
      %v611 = vshrl.u32 %v610, 7
      %v612 = vsub.s32 0, %v611
      %v613 = vrot.slane %v605, %v612
      %v614 = vlaneseq
      %v615 = vshrl.u32 %v614, 7
      %v616 = vsub.s32 1, %v615
      %v617 = vrot.slane %v605, %v616
      %v618 = vlaneseq
      %v619 = vshrl.u32 %v618, 7
      %v620 = vsub.s32 2, %v619
      %v621 = vrot.slane %v605, %v620
      %v622 = vlaneseq
      %v623 = vshrl.u32 %v622, 7
      %v624 = vsub.s32 3, %v623
      %v625 = vrot.slane %v605, %v624
      %v626 = vlaneseq
      %v627 = vshrl.u32 %v626, 7
      %v628 = vsub.s32 4, %v627
      %v629 = vrot.slane %v605, %v628
      %v630 = vlaneseq
      %v631 = vshrl.u32 %v630, 7
      %v632 = vsub.s32 5, %v631
      %v633 = vrot.slane %v605, %v632
      %v634 = vlaneseq
      %v635 = vshrl.u32 %v634, 7
      %v636 = vsub.s32 6, %v635
      %v637 = vrot.slane %v605, %v636
      %v638 = vlaneseq
      %v639 = vshrl.u32 %v638, 7
      %v640 = vsub.s32 7, %v639
      %v641 = vrot.slane %v605, %v640
      %v650 = vsub.f32 %v513, %v613
      %v651 = vsub.f32 %v514, %v617
      %v652 = vsub.f32 %v515, %v621
      %v653 = vsub.f32 %v516, %v625
      %v654 = vsub.f32 %v517, %v629
      %v655 = vsub.f32 %v518, %v633
      %v656 = vsub.f32 %v519, %v637
      %v657 = vsub.f32 %v520, %v641
      %v658 = vmul.f32 %v650, 1.442695
      %v659 = vpow.pop %v658
      %v660 = vmul.f32 %v651, 1.442695
      %v661 = vpow.pop %v660
      %v662 = vmul.f32 %v652, 1.442695
      %v663 = vpow.pop %v662
      %v664 = vmul.f32 %v653, 1.442695
      %v665 = vpow.pop %v664
      %v666 = vmul.f32 %v654, 1.442695
      %v667 = vpow.pop %v666
      %v668 = vmul.f32 %v655, 1.442695
      %v669 = vpow.pop %v668
      %v670 = vmul.f32 %v656, 1.442695
      %v671 = vpow.pop %v670
      %v672 = vmul.f32 %v657, 1.442695
      %v673 = vpow.pop %v672
      %v674 = vmul.f32 %v608, 0.0
      %683 = vset.pattern.permute.xlu0 0
      %684 = vperm.xlu0 %683, %v659
      %v685 = vpop.permute.xlu0 %684
      %686 = vset.pattern.permute.xlu0 0
      %687 = vperm.xlu0 %686, %v661
      %v688 = vpop.permute.xlu0 %687
      %689 = vset.pattern.permute.xlu0 0
      %690 = vperm.xlu0 %689, %v663
      %v691 = vpop.permute.xlu0 %690
      %692 = vset.pattern.permute.xlu0 0
      %693 = vperm.xlu0 %692, %v665
      %v694 = vpop.permute.xlu0 %693
      %695 = vset.pattern.permute.xlu0 0
      %696 = vperm.xlu0 %695, %v667
      %v697 = vpop.permute.xlu0 %696
      %698 = vset.pattern.permute.xlu0 0
      %699 = vperm.xlu0 %698, %v669
      %v700 = vpop.permute.xlu0 %699
      %701 = vset.pattern.permute.xlu0 0
      %702 = vperm.xlu0 %701, %v671
      %v703 = vpop.permute.xlu0 %702
      %704 = vset.pattern.permute.xlu0 0
      %705 = vperm.xlu0 %704, %v673
      %v706 = vpop.permute.xlu0 %705
      %v707 = vlaneseq
      %v708 = vshrl.u32 %v707, 7
      %v709 = vsub.s32 %v554, %v708
      %v710 = vrot.slane %v685, %v709
      %v711 = vlaneseq
      %v712 = vshrl.u32 %v711, 7
      %v713 = vsub.s32 %v554, %v712
      %v714 = vrot.slane %v688, %v713
      %v715 = vlaneseq
      %v716 = vshrl.u32 %v715, 7
      %v717 = vsub.s32 %v554, %v716
      %v718 = vrot.slane %v691, %v717
      %v719 = vlaneseq
      %v720 = vshrl.u32 %v719, 7
      %v721 = vsub.s32 %v554, %v720
      %v722 = vrot.slane %v694, %v721
      %v723 = vlaneseq
      %v724 = vshrl.u32 %v723, 7
      %v725 = vsub.s32 %v554, %v724
      %v726 = vrot.slane %v697, %v725
      %v727 = vlaneseq
      %v728 = vshrl.u32 %v727, 7
      %v729 = vsub.s32 %v554, %v728
      %v730 = vrot.slane %v700, %v729
      %v731 = vlaneseq
      %v732 = vshrl.u32 %v731, 7
      %v733 = vsub.s32 %v554, %v732
      %v734 = vrot.slane %v703, %v733
      %v735 = vlaneseq
      %v736 = vshrl.u32 %v735, 7
      %v737 = vsub.s32 %v554, %v736
      %v738 = vrot.slane %v706, %v737
      %v739 = vsel %vm587, %v714, %v710
      %v740 = vsel %vm589, %v718, %v739
      %v741 = vsel %vm591, %v722, %v740
      %v742 = vsel %vm593, %v726, %v741
      %v743 = vsel %vm595, %v730, %v742
      %v744 = vsel %vm597, %v734, %v743
      %v745 = vsel %vm599, %v738, %v744
      %v747 = vsel %vm602, %v745, 0.0
      %748 = vadd.xlane.f32.xlu0 %v747
      %v749 = vpop.xlane.xlu0 %748
      %v750 = vadd.f32 %v674, %v749
      %v751 = vunpack.c.l.bf16 %v182
      %v752 = vunpack.c.l.bf16 %v183
      %v753 = vunpack.c.l.bf16 %v184
      %v754 = vunpack.c.l.bf16 %v185
      %v755 = vunpack.c.l.bf16 %v186
      %v756 = vunpack.c.l.bf16 %v187
      %v757 = vunpack.c.l.bf16 %v188
      %v758 = vunpack.c.l.bf16 %v189
      %v767 = vmul.f32 %v685, %v751
      %v768 = vmul.f32 %v688, %v752
      %v769 = vmul.f32 %v691, %v753
      %v770 = vmul.f32 %v694, %v754
      %v771 = vmul.f32 %v697, %v755
      %v772 = vmul.f32 %v700, %v756
      %v773 = vmul.f32 %v703, %v757
      %v774 = vmul.f32 %v706, %v758
      %v775 = vsel %vm137, %v767, 0.0
      %v776 = vrot.slane %v775, 4
      %v777 = vadd.f32 %v775, %v776
      %v778 = vrot.slane %v777, 2
      %v779 = vadd.f32 %v777, %v778
      %v780 = vrot.slane %v779, 1
      %v781 = vadd.f32 %v779, %v780
      %v782 = vsel %vm137, %v768, 0.0
      %v783 = vrot.slane %v782, 4
      %v784 = vadd.f32 %v782, %v783
      %v785 = vrot.slane %v784, 2
      %v786 = vadd.f32 %v784, %v785
      %v787 = vrot.slane %v786, 1
      %v788 = vadd.f32 %v786, %v787
      %v789 = vsel %vm137, %v769, 0.0
      %v790 = vrot.slane %v789, 4
      %v791 = vadd.f32 %v789, %v790
      %v792 = vrot.slane %v791, 2
      %v793 = vadd.f32 %v791, %v792
      %v794 = vrot.slane %v793, 1
      %v795 = vadd.f32 %v793, %v794
      %v796 = vsel %vm137, %v770, 0.0
      %v797 = vrot.slane %v796, 4
      %v798 = vadd.f32 %v796, %v797
      %v799 = vrot.slane %v798, 2
      %v800 = vadd.f32 %v798, %v799
      %v801 = vrot.slane %v800, 1
      %v802 = vadd.f32 %v800, %v801
      %v803 = vsel %vm137, %v771, 0.0
      %v804 = vrot.slane %v803, 4
      %v805 = vadd.f32 %v803, %v804
      %v806 = vrot.slane %v805, 2
      %v807 = vadd.f32 %v805, %v806
      %v808 = vrot.slane %v807, 1
      %v809 = vadd.f32 %v807, %v808
      %v810 = vsel %vm137, %v772, 0.0
      %v811 = vrot.slane %v810, 4
      %v812 = vadd.f32 %v810, %v811
      %v813 = vrot.slane %v812, 2
      %v814 = vadd.f32 %v812, %v813
      %v815 = vrot.slane %v814, 1
      %v816 = vadd.f32 %v814, %v815
      %v817 = vsel %vm137, %v773, 0.0
      %v818 = vrot.slane %v817, 4
      %v819 = vadd.f32 %v817, %v818
      %v820 = vrot.slane %v819, 2
      %v821 = vadd.f32 %v819, %v820
      %v822 = vrot.slane %v821, 1
      %v823 = vadd.f32 %v821, %v822
      %v824 = vsel %vm137, %v774, 0.0
      %v825 = vrot.slane %v824, 4
      %v826 = vadd.f32 %v824, %v825
      %v827 = vrot.slane %v826, 2
      %v828 = vadd.f32 %v826, %v827
      %v829 = vrot.slane %v828, 1
      %v830 = vadd.f32 %v828, %v829
      %v839 = vsel %vm587, %v788, %v781
      %v840 = vsel %vm589, %v795, %v839
      %v841 = vsel %vm591, %v802, %v840
      %v842 = vsel %vm593, %v809, %v841
      %v843 = vsel %vm595, %v816, %v842
      %v844 = vsel %vm597, %v823, %v843
      %v845 = vsel %vm599, %v830, %v844
      %v847 = vadd.f32 %v674, %v845
      %v848 = vrcp.pop %v750
      %v849 = vmul.f32 %v847, %v848
      %v850 = vpack.c.bf16 %v849, %v849
      %v851 = vld [vmem:[%s9] sm:$0xf]
      %v852 = vld [vmem:[%s9 + $0x4] sm:$0xf]
      %v853 = vld [vmem:[%s9 + $0x8] sm:$0xf]
      %v854 = vld [vmem:[%s9 + $0xc] sm:$0xf]
      %v855 = vld [vmem:[%s10] sm:$0xf]
      %v856 = vld [vmem:[%s10 + $0x4] sm:$0xf]
      %v857 = vld [vmem:[%s10 + $0x8] sm:$0xf]
      %v858 = vld [vmem:[%s10 + $0xc] sm:$0xf]
      %v863 = vunpack.c.l.b16 %v855
      %v864 = vunpack.c.l.b16 %v856
      %v865 = vunpack.c.l.b16 %v857
      %v866 = vunpack.c.l.b16 %v858
      %v867 = vpack.c.b16 %v864, %v863
      %v868 = vpack.c.b16 %v866, %v865
      %v872 = vsel %vm137, %v850, 0
      %874 = vmatprep.subr.bf16.mxu0 0
      %875 = vmatpush1.bf16.msra.mxu0 %v867
      %876 = vmatprep.subr.bf16.mxu0 0
      %877 = vmatpush1.bf16.msra.mxu0 %v868
      %878 = vmatprep.subr.bf16.mxu0 0
      %879 = vmatpush1.bf16.msra.mxu0 0
      %880 = vmatprep.subr.bf16.mxu0 0
      %881 = vmatpush1.bf16.msra.mxu0 0
      %882 = vmatprep.subr.bf16.mxu0 0
      %883 = vmatpush1.bf16.msra.mxu0 0
      %884 = vmatprep.subr.bf16.mxu0 0
      %885 = vmatpush1.bf16.msra.mxu0 0
      %886 = vmatprep.subr.bf16.mxu0 0
      %887 = vmatpush1.bf16.msra.mxu0 0
      %888 = vmatprep.subr.bf16.mxu0 0
      %889 = vmatpush1.bf16.msra.mxu0 0
      %890 = vmatprep.subr.bf16.mxu0 0
      %891 = vmatpush1.bf16.msra.mxu0 0
      %892 = vmatprep.subr.bf16.mxu0 0
      %893 = vmatpush1.bf16.msra.mxu0 0
      %894 = vmatprep.subr.bf16.mxu0 0
      %895 = vmatpush1.bf16.msra.mxu0 0
      %896 = vmatprep.subr.bf16.mxu0 0
      %897 = vmatpush1.bf16.msra.mxu0 0
      %898 = vmatprep.subr.bf16.mxu0 0
      %899 = vmatpush1.bf16.msra.mxu0 0
      %900 = vmatprep.subr.bf16.mxu0 0
      %901 = vmatpush1.bf16.msra.mxu0 0
      %902 = vmatprep.subr.bf16.mxu0 0
      %903 = vmatpush1.bf16.msra.mxu0 0
      %904 = vmatprep.subr.bf16.mxu0 0
      %905 = vmatpush1.bf16.msra.mxu0 0
      %906 = vmatprep.mubr.bf16.mxu0 0
      %907 = vmatmul.mubr.bf16.gmra.mrb[0].mxu0 %v872
      %v908 = vpop.f32.mrb[0].mxu0
      %v909 = vadd.f32 0.0, %v908
      %v910 = vpop.f32.mrb[0].mxu0
      %v911 = vpop.f32.mrb[0].mxu0
      %v912 = vpop.f32.mrb[0].mxu0
      %913 = vdwg.mxu0
      %v918 = vunpack.c.l.b16 %v851
      %v919 = vunpack.c.l.b16 %v852
      %v920 = vunpack.c.l.b16 %v853
      %v921 = vunpack.c.l.b16 %v854
      %v922 = vpack.c.b16 %v919, %v918
      %v923 = vpack.c.b16 %v921, %v920
      %v927 = vsel %vm137, %v110, 0
      %929 = vmatprep.subr.bf16.mxu0 0
      %930 = vmatpush1.bf16.msra.mxu0 %v922
      %931 = vmatprep.subr.bf16.mxu0 0
      %932 = vmatpush1.bf16.msra.mxu0 %v923
      %933 = vmatprep.subr.bf16.mxu0 0
      %934 = vmatpush1.bf16.msra.mxu0 0
      %935 = vmatprep.subr.bf16.mxu0 0
      %936 = vmatpush1.bf16.msra.mxu0 0
      %937 = vmatprep.subr.bf16.mxu0 0
      %938 = vmatpush1.bf16.msra.mxu0 0
      %939 = vmatprep.subr.bf16.mxu0 0
      %940 = vmatpush1.bf16.msra.mxu0 0
      %941 = vmatprep.subr.bf16.mxu0 0
      %942 = vmatpush1.bf16.msra.mxu0 0
      %943 = vmatprep.subr.bf16.mxu0 0
      %944 = vmatpush1.bf16.msra.mxu0 0
      %945 = vmatprep.subr.bf16.mxu0 0
      %946 = vmatpush1.bf16.msra.mxu0 0
      %947 = vmatprep.subr.bf16.mxu0 0
      %948 = vmatpush1.bf16.msra.mxu0 0
      %949 = vmatprep.subr.bf16.mxu0 0
      %950 = vmatpush1.bf16.msra.mxu0 0
      %951 = vmatprep.subr.bf16.mxu0 0
      %952 = vmatpush1.bf16.msra.mxu0 0
      %953 = vmatprep.subr.bf16.mxu0 0
      %954 = vmatpush1.bf16.msra.mxu0 0
      %955 = vmatprep.subr.bf16.mxu0 0
      %956 = vmatpush1.bf16.msra.mxu0 0
      %957 = vmatprep.subr.bf16.mxu0 0
      %958 = vmatpush1.bf16.msra.mxu0 0
      %959 = vmatprep.subr.bf16.mxu0 0
      %960 = vmatpush1.bf16.msra.mxu0 0
      %961 = vmatprep.mubr.bf16.mxu0 0
      %962 = vmatmul.mubr.bf16.gmra.mrb[0].mxu0 %v927
      %v963 = vpop.f32.mrb[0].mxu0
      %v964 = vadd.f32 %v909, %v963
      %v965 = vpop.f32.mrb[0].mxu0
      %v966 = vpop.f32.mrb[0].mxu0
      %v967 = vpop.f32.mrb[0].mxu0
      %968 = vdwg.mxu0
      %v969 = vld [vmem:[%s11] sm:$0xf]
      %v970 = vld [vmem:[%s11 + $0x4] sm:$0xf]
      %v971 = vld [vmem:[%s11 + $0x8] sm:$0xf]
      %v972 = vld [vmem:[%s11 + $0xc] sm:$0xf]
      %v977 = vunpack.c.l.b16 %v969
      %v978 = vunpack.c.l.b16 %v970
      %v979 = vunpack.c.l.b16 %v971
      %v980 = vunpack.c.l.b16 %v972
      %v981 = vpack.c.b16 %v978, %v977
      %v982 = vpack.c.b16 %v980, %v979
      %985 = vmatprep.subr.bf16.mxu0 0
      %986 = vmatpush1.bf16.msra.mxu0 %v981
      %987 = vmatprep.subr.bf16.mxu0 0
      %988 = vmatpush1.bf16.msra.mxu0 %v982
      %989 = vmatprep.subr.bf16.mxu0 0
      %990 = vmatpush1.bf16.msra.mxu0 0
      %991 = vmatprep.subr.bf16.mxu0 0
      %992 = vmatpush1.bf16.msra.mxu0 0
      %993 = vmatprep.subr.bf16.mxu0 0
      %994 = vmatpush1.bf16.msra.mxu0 0
      %995 = vmatprep.subr.bf16.mxu0 0
      %996 = vmatpush1.bf16.msra.mxu0 0
      %997 = vmatprep.subr.bf16.mxu0 0
      %998 = vmatpush1.bf16.msra.mxu0 0
      %999 = vmatprep.subr.bf16.mxu0 0
      %1000 = vmatpush1.bf16.msra.mxu0 0
      %1001 = vmatprep.subr.bf16.mxu0 0
      %1002 = vmatpush1.bf16.msra.mxu0 0
      %1003 = vmatprep.subr.bf16.mxu0 0
      %1004 = vmatpush1.bf16.msra.mxu0 0
      %1005 = vmatprep.subr.bf16.mxu0 0
      %1006 = vmatpush1.bf16.msra.mxu0 0
      %1007 = vmatprep.subr.bf16.mxu0 0
      %1008 = vmatpush1.bf16.msra.mxu0 0
      %1009 = vmatprep.subr.bf16.mxu0 0
      %1010 = vmatpush1.bf16.msra.mxu0 0
      %1011 = vmatprep.subr.bf16.mxu0 0
      %1012 = vmatpush1.bf16.msra.mxu0 0
      %1013 = vmatprep.subr.bf16.mxu0 0
      %1014 = vmatpush1.bf16.msra.mxu0 0
      %1015 = vmatprep.subr.bf16.mxu0 0
      %1016 = vmatpush1.bf16.msra.mxu0 0
      %1017 = vmatprep.mubr.bf16.mxu0 0
      %1018 = vmatmul.mubr.bf16.gmra.mrb[0].mxu0 %v139
      %v1019 = vpop.f32.mrb[0].mxu0
      %v1020 = vadd.f32 0.0, %v1019
      %v1021 = vpop.f32.mrb[0].mxu0
      %v1022 = vpop.f32.mrb[0].mxu0
      %v1023 = vpop.f32.mrb[0].mxu0
      %1024 = vdwg.mxu0
      %v1025 = vadd.f32 %v964, %v1020
      %v1026 = vld [vmem:[%s12] sm:$0x1]
      %v1028 = vlaneseq
      %v1029 = vshrl.u32 %v1028, 7
      %v1030 = vsub.s32 0, %v1029
      %v1031 = vrot.slane %v1026, %v1030
      %v1033 = vadd.f32 %v1025, %v1031
      %v1034 = vmul.f32 %v1033, 0.5
      %v1035 = vtanh.pop %v1034
      %v1036 = vadd.f32 %v1035, 1.0
      %v1037 = vmul.f32 %v1036, 0.5
      %v1038 = vtanh.pop %v1033
      %1040 = vrot.lane.b32.xlu0 %v112, 32
      %v1041 = vpop.permute.xlu0 %1040
      %v1043 = vmul.f32 %v1037, %v1041
      %1045 = vrot.lane.b32.xlu0 %v1038, 64
      %v1046 = vpop.permute.xlu0 %1045
      %v1048 = vmul.f32 %v1037, %v1046
      %1050 = vrot.lane.b32.xlu0 %v1048, 32
      %v1051 = vpop.permute.xlu0 %1050
      %v1053 = vadd.f32 %v1043, %v1051
      %v1054 = vtanh.pop %v1053
      %1056 = vrot.lane.b32.xlu0 %v1054, 64
      %v1057 = vpop.permute.xlu0 %1056
      %v1059 = vmul.f32 %v1037, %v1057
      %1061 = vrot.lane.b32.xlu0 %v1059, 32
      %v1062 = vpop.permute.xlu0 %1061
      %1064 = vst.msk [vmem:[%s17] sm:$0xff] %vm137, %v1062
      %1066 = vrot.lane.b32.xlu0 %v1053, 96
      %v1067 = vpop.permute.xlu0 %1066
      %1069 = vst.msk [vmem:[%s18] sm:$0xff] %vm137, %v1067
      %1071 = vrot.lane.b32.xlu0 %v849, 96
      %v1072 = vpop.permute.xlu0 %1071
      %v1074 = vmul.f32 %v1059, %v1072
      %v1075 = vpack.c.bf16 %v1074, %v1074
      %v1077 = vunpack.c.l.b16 %v1075
      %v1078 = vpack.c.b16 %v1077, %v1077
      %1079 = vrot.lane.b32.xlu0 %v1078, 32
      %v1080 = vpop.permute.xlu0 %1079
      %vm1082 = vcmask 257024
      %1083 = vst.msk [vmem:[#allocation2] sm:$0xf] %vm1082, %v1080
    $region85: #{step.1} parent=1 // pred_fallthru
      _
    %v1084 = vld [vmem:[#allocation2] sm:$0xf]
    %v1085 = vld [vmem:[%s13] sm:$0xf]
    %v1086 = vld [vmem:[%s13 + $0x4] sm:$0xf]
    %v1087 = vld [vmem:[%s13 + $0x8] sm:$0xf]
    %v1088 = vld [vmem:[%s13 + $0xc] sm:$0xf]
    %v1089 = vld [vmem:[%s0] sm:$0xf]
    %v1090 = vld [vmem:[%s14] sm:$0xf]
    %v1091 = vld [vmem:[%s14 + $0x4] sm:$0xf]
    %v1092 = vld [vmem:[%s14 + $0x8] sm:$0xf]
    %v1093 = vld [vmem:[%s14 + $0xc] sm:$0xf]
    %v1098 = vunpack.c.l.b16 %v1090
    %v1099 = vunpack.c.l.b16 %v1091
    %v1100 = vunpack.c.l.b16 %v1092
    %v1101 = vunpack.c.l.b16 %v1093
    %v1102 = vpack.c.b16 %v1099, %v1098
    %v1103 = vpack.c.b16 %v1101, %v1100
    %vm1106 = vcmask 261120
    %v1108 = vsel %vm1106, %v1089, 0
    %1110 = vmatprep.subr.bf16.mxu0 0
    %1111 = vmatpush1.bf16.msra.mxu0 %v1102
    %1112 = vmatprep.subr.bf16.mxu0 0
    %1113 = vmatpush1.bf16.msra.mxu0 %v1103
    %1114 = vmatprep.subr.bf16.mxu0 0
    %1115 = vmatpush1.bf16.msra.mxu0 0
    %1116 = vmatprep.subr.bf16.mxu0 0
    %1117 = vmatpush1.bf16.msra.mxu0 0
    %1118 = vmatprep.subr.bf16.mxu0 0
    %1119 = vmatpush1.bf16.msra.mxu0 0
    %1120 = vmatprep.subr.bf16.mxu0 0
    %1121 = vmatpush1.bf16.msra.mxu0 0
    %1122 = vmatprep.subr.bf16.mxu0 0
    %1123 = vmatpush1.bf16.msra.mxu0 0
    %1124 = vmatprep.subr.bf16.mxu0 0
    %1125 = vmatpush1.bf16.msra.mxu0 0
    %1126 = vmatprep.subr.bf16.mxu0 0
    %1127 = vmatpush1.bf16.msra.mxu0 0
    %1128 = vmatprep.subr.bf16.mxu0 0
    %1129 = vmatpush1.bf16.msra.mxu0 0
    %1130 = vmatprep.subr.bf16.mxu0 0
    %1131 = vmatpush1.bf16.msra.mxu0 0
    %1132 = vmatprep.subr.bf16.mxu0 0
    %1133 = vmatpush1.bf16.msra.mxu0 0
    %1134 = vmatprep.subr.bf16.mxu0 0
    %1135 = vmatpush1.bf16.msra.mxu0 0
    %1136 = vmatprep.subr.bf16.mxu0 0
    %1137 = vmatpush1.bf16.msra.mxu0 0
    %1138 = vmatprep.subr.bf16.mxu0 0
    %1139 = vmatpush1.bf16.msra.mxu0 0
    %1140 = vmatprep.subr.bf16.mxu0 0
    %1141 = vmatpush1.bf16.msra.mxu0 0
    %1142 = vmatprep.mubr.bf16.mxu0 0
    %1143 = vmatmul.mubr.bf16.gmra.mrb[0].mxu0 %v1108
    %v1144 = vpop.f32.mrb[0].mxu0
    %v1145 = vadd.f32 0.0, %v1144
    %v1146 = vpop.f32.mrb[0].mxu0
    %v1147 = vpop.f32.mrb[0].mxu0
    %v1148 = vpop.f32.mrb[0].mxu0
    %1149 = vdwg.mxu0
    %v1154 = vunpack.c.l.b16 %v1085
    %v1155 = vunpack.c.l.b16 %v1086
    %v1156 = vunpack.c.l.b16 %v1087
    %v1157 = vunpack.c.l.b16 %v1088
    %v1158 = vpack.c.b16 %v1155, %v1154
    %v1159 = vpack.c.b16 %v1157, %v1156
    %v1163 = vsel %vm1106, %v1084, 0
    %1165 = vmatprep.subr.bf16.mxu0 0
    %1166 = vmatpush1.bf16.msra.mxu0 %v1158
    %1167 = vmatprep.subr.bf16.mxu0 0
    %1168 = vmatpush1.bf16.msra.mxu0 %v1159
    %1169 = vmatprep.subr.bf16.mxu0 0
    %1170 = vmatpush1.bf16.msra.mxu0 0
    %1171 = vmatprep.subr.bf16.mxu0 0
    %1172 = vmatpush1.bf16.msra.mxu0 0
    %1173 = vmatprep.subr.bf16.mxu0 0
    %1174 = vmatpush1.bf16.msra.mxu0 0
    %1175 = vmatprep.subr.bf16.mxu0 0
    %1176 = vmatpush1.bf16.msra.mxu0 0
    %1177 = vmatprep.subr.bf16.mxu0 0
    %1178 = vmatpush1.bf16.msra.mxu0 0
    %1179 = vmatprep.subr.bf16.mxu0 0
    %1180 = vmatpush1.bf16.msra.mxu0 0
    %1181 = vmatprep.subr.bf16.mxu0 0
    %1182 = vmatpush1.bf16.msra.mxu0 0
    %1183 = vmatprep.subr.bf16.mxu0 0
    %1184 = vmatpush1.bf16.msra.mxu0 0
    %1185 = vmatprep.subr.bf16.mxu0 0
    %1186 = vmatpush1.bf16.msra.mxu0 0
    %1187 = vmatprep.subr.bf16.mxu0 0
    %1188 = vmatpush1.bf16.msra.mxu0 0
    %1189 = vmatprep.subr.bf16.mxu0 0
    %1190 = vmatpush1.bf16.msra.mxu0 0
    %1191 = vmatprep.subr.bf16.mxu0 0
    %1192 = vmatpush1.bf16.msra.mxu0 0
    %1193 = vmatprep.subr.bf16.mxu0 0
    %1194 = vmatpush1.bf16.msra.mxu0 0
    %1195 = vmatprep.subr.bf16.mxu0 0
    %1196 = vmatpush1.bf16.msra.mxu0 0
    %1197 = vmatprep.mubr.bf16.mxu0 0
    %1198 = vmatmul.mubr.bf16.gmra.mrb[0].mxu0 %v1163
    %v1199 = vpop.f32.mrb[0].mxu0
    %v1200 = vadd.f32 %v1145, %v1199
    %v1201 = vpop.f32.mrb[0].mxu0
    %v1202 = vpop.f32.mrb[0].mxu0
    %v1203 = vpop.f32.mrb[0].mxu0
    %1204 = vdwg.mxu0
    %v1205 = vld [vmem:[%s15] sm:$0x1]
    %v1207 = vlaneseq
    %v1208 = vshrl.u32 %v1207, 7
    %v1209 = vsub.s32 0, %v1208
    %v1210 = vrot.slane %v1205, %v1209
    %v1212 = vadd.f32 %v1200, %v1210
    %1213 = vst [vmem:[%s16] sm:$0xff] %v1212
    // Predicated region
    $region86: #{step.1} parent=1 // pred_check
      _
    $region87: #{step.1} parent=1 // pred_check_branch
      %1215 = sbr.rel (0) target = $region89
    $region88: #{step.1} parent=1 // pred_region
      _
    $region89: #{step.1} parent=1 // pred_fallthru
      _
    // Predicated region
    $region90: #{step.1} parent=1 // pred_check
      _
    $region91: #{step.1} parent=1 // pred_check_branch
      %1217 = sbr.rel (0) target = $region93
    $region92: #{step.1} parent=1 // pred_region
      _
    $region93: #{step.1} parent=1 // pred_fallthru
      _
    // Predicated region
    $region94: #{step.1} parent=1 // pred_check
      _
    $region95: #{step.1} parent=1 // pred_check_branch
      %1219 = sbr.rel (0) target = $region97
    $region96: #{step.1} parent=1 // pred_region
      _
    $region97: #{step.1} parent=1 // pred_fallthru
      _
    // Predicated region
    $region98: #{step.1} parent=1 // pred_check
      _
    $region99: #{step.1} parent=1 // pred_check_branch
      %1221 = sbr.rel (0) target = $region101
    $region100: #{step.1} parent=1 // pred_region
      _
    $region101: #{step.1} parent=1 // pred_fallthru
      _
    // Predicated region
    $region102: #{step.1} parent=1 // pred_check
      _
    $region103: #{step.1} parent=1 // pred_check_branch
      %1223 = sbr.rel (0) target = $region105
    $region104: #{step.1} parent=1 // pred_region
      _
    $region105: #{step.1} parent=1 // pred_fallthru
      _
    // Predicated region
    $region106: #{step.1} parent=1 // pred_check
      _
    $region107: #{step.1} parent=1 // pred_check_branch
      %1225 = sbr.rel (0) target = $region109
    $region108: #{step.1} parent=1 // pred_region
      _
    $region109: #{step.1} parent=1 // pred_fallthru
      _
    %1226 = vsyncpa [#allocation4], 1
    %1227 = vsyncpa [#allocation6], 1
    %1228 = vsyncpa [#allocation9], 1

</llo_original>
